<compile_context>
chip_gen: v7x
topology: tpu7x:2x2x1
jax: 0.10.0
libtpu: 0.0.40
codegen_flags: <defaults>
</compile_context>

<pallas_src>
import functools

import jax
import jax.numpy as jnp
from jax.experimental import pallas as pl
from jax.experimental.pallas import tpu as pltpu


_VMEM_SPEC = pl.BlockSpec(memory_space=pltpu.MemorySpace.VMEM)


# ----------------------------------------------------------------------------
# Kernel 1: fused relu(x @ W + b) for the im2col'd convolutions.
# Single whole-array block, no grid.
# ----------------------------------------------------------------------------
def _matmul_bias_relu_kernel(x_ref, w_ref, b_ref, o_ref):
    y = jnp.dot(x_ref[...], w_ref[...], preferred_element_type=jnp.float32)
    o_ref[...] = jnp.maximum(y + b_ref[...], 0.0).astype(o_ref.dtype)


def matmul_bias_relu(x, w, b2):
    """relu(x @ w + b2); x:(M,K), w:(K,N), b2:(1,N). One launch, whole arrays in VMEM."""
    M = x.shape[0]
    N = w.shape[1]
    return pl.pallas_call(
        _matmul_bias_relu_kernel,
        out_shape=jax.ShapeDtypeStruct((M, N), jnp.float32),
        in_specs=[_VMEM_SPEC, _VMEM_SPEC, _VMEM_SPEC],
        out_specs=_VMEM_SPEC,
    )(x, w, b2)


# ----------------------------------------------------------------------------
# Kernel 2: fully fused fc + all three heads.
#   h  = relu(flat @ Wfc + bfc)               (M, 512)
#   h1 = h @ W1 + b1                          (M, 768)   [mean1 | ls1 | bin1]
#   y  = h1 @ W2 + b2                         (M, 128)   block-diag packed, lane-dense
#   std columns get exp(clip(., -20, 2)) in-kernel (lane mask, no cross-lane movement).
# ----------------------------------------------------------------------------
def _make_fused_fc_heads_kernel(n_cont):
    lo, hi = n_cont, 2 * n_cont

    def kernel(flat_ref, wfc_ref, bfc_ref, w1_ref, b1_ref, w2_ref, b2_ref, o_ref):
        h = jnp.dot(flat_ref[...], wfc_ref[...], preferred_element_type=jnp.float32)
        h = jnp.maximum(h + bfc_ref[...], 0.0)
        h1 = jnp.dot(h, w1_ref[...], preferred_element_type=jnp.float32) + b1_ref[...]
        y = jnp.dot(h1, w2_ref[...], preferred_element_type=jnp.float32) + b2_ref[...]
        lane = jax.lax.broadcasted_iota(jnp.int32, y.shape, 1)
        is_std = (lane >= lo) & (lane < hi)
        y = jnp.where(is_std, jnp.exp(jnp.clip(y, -20.0, 2.0)), y)
        o_ref[...] = y.astype(o_ref.dtype)

    return kernel


def fused_fc_heads(flat, q, n_cont, out_pad=128):
    M = flat.shape[0]
    return pl.pallas_call(
        _make_fused_fc_heads_kernel(n_cont),
        out_shape=jax.ShapeDtypeStruct((M, out_pad), jnp.float32),
        in_specs=[_VMEM_SPEC] * 7,
        out_specs=_VMEM_SPEC,
    )(flat, q["fc_w"], q["fc_b"], q["head1_w"], q["head1_b"], q["head2_w"], q["head2_b"])


# ----------------------------------------------------------------------------
# im2col glue (NHWC, valid padding).  K-axis ordering is (kh, kw, Cin), which
# matches the prepped weight layout below.  No transposes.
# ----------------------------------------------------------------------------
def im2col_nhwc(x, kh, kw, stride):
    N, H, W, C = x.shape
    Ho = (H - kh) // stride + 1
    Wo = (W - kw) // stride + 1
    cols = [
        x[:, i:i + stride * Ho:stride, j:j + stride * Wo:stride, :]
        for i in range(kh) for j in range(kw)
    ]
    col = jnp.concatenate(cols, axis=-1)           # (N, Ho, Wo, kh*kw*C)
    return col.reshape(N * Ho * Wo, kh * kw * C), Ho, Wo


def conv2d_relu_nhwc(x, w_mat, b2, kh, kw, stride):
    """x: (N,H,W,C) NHWC; w_mat: (kh*kw*Cin, Cout) prepped; returns NHWC."""
    N = x.shape[0]
    Cout = w_mat.shape[1]
    col, Ho, Wo = im2col_nhwc(x, kh, kw, stride)
    y = matmul_bias_relu(col, w_mat, b2)            # (N*Ho*Wo, Cout)
    return y.reshape(N, Ho, Wo, Cout)


# ----------------------------------------------------------------------------
# Parameters.  init_params keeps a "PyTorch-like" layout; prep_params converts
# it ONCE into the kernel-ready layout (weight transposes, NHWC flatten
# permutation of fc, head concatenation / block-diag packing, bias folds).
# ----------------------------------------------------------------------------
def init_params(key, in_channels, flattened_size, action_dim):
    def uniform(k, shape, fan_in):
        bound = 1.0 / jnp.sqrt(jnp.float32(fan_in))
        return jax.random.uniform(k, shape, jnp.float32, -bound, bound)

    keys = jax.random.split(key, 24)
    ki = iter(keys)
    p = {}
    # conv weights in PyTorch layout (Cout, Cin, kh, kw)
    p["conv1_w"] = uniform(next(ki), (32, in_channels, 8, 8), in_channels * 8 * 8)
    p["conv1_b"] = uniform(next(ki), (32,), in_channels * 8 * 8)
    p["conv2_w"] = uniform(next(ki), (64, 32, 4, 4), 32 * 4 * 4)
    p["conv2_b"] = uniform(next(ki), (64,), 32 * 4 * 4)
    p["conv3_w"] = uniform(next(ki), (128, 64, 3, 3), 64 * 3 * 3)
    p["conv3_b"] = uniform(next(ki), (128,), 64 * 3 * 3)
    # linear weights stored (in, out)
    p["fc_w"] = uniform(next(ki), (flattened_size, 512), flattened_size)
    p["fc_b"] = uniform(next(ki), (512,), flattened_size)
    n_cont = action_dim - 3
    for name, n_out in (("mean", n_cont), ("ls", n_cont), ("bin", 3)):
        p[f"{name}1_w"] = uniform(next(ki), (512, 256), 512)
        p[f"{name}1_b"] = uniform(next(ki), (256,), 512)
        p[f"{name}2_w"] = uniform(next(ki), (256, n_out), 256)
        p[f"{name}2_b"] = uniform(next(ki), (n_out,), 256)
    p["forward_bias"] = jnp.float32(10.0)
    return p


def prep_params(p, conv_out_hw, out_pad=128):
    """One-time conversion into kernel-ready layout (runs outside the jitted forward)."""
    q = {}
    # conv weights: (Cout, Cin, kh, kw) -> (kh, kw, Cin, Cout) -> (kh*kw*Cin, Cout),
    # matching the NHWC im2col K ordering.
    for name in ("conv1", "conv2", "conv3"):
        w = p[f"{name}_w"]
        cout = w.shape[0]
        q[f"{name}_w"] = w.transpose(2, 3, 1, 0).reshape(-1, cout)
        q[f"{name}_b"] = p[f"{name}_b"].reshape(1, cout)

    # fc: permute its input axis from PyTorch's NCHW-flatten order (C,H,W) to the
    # NHWC-flatten order (H,W,C) the conv kernels produce -> no runtime transpose.
    Hc, Wc = conv_out_hw
    C3 = p["conv3_w"].shape[0]
    fc_out = p["fc_w"].shape[1]
    wfc = p["fc_w"].reshape(C3, Hc, Wc, fc_out).transpose(1, 2, 0, 3)
    q["fc_w"] = wfc.reshape(C3 * Hc * Wc, fc_out)
    q["fc_b"] = p["fc_b"].reshape(1, fc_out)

    # head layer 1: concat mean1|ls1|bin1 -> single (512, 768) lane-dense GEMM.
    q["head1_w"] = jnp.concatenate([p["mean1_w"], p["ls1_w"], p["bin1_w"]], axis=1)
    q["head1_b"] = jnp.concatenate(
        [p["mean1_b"], p["ls1_b"], p["bin1_b"]]).reshape(1, -1)

    # head layer 2: block-diagonal packing into a lane-dense (3*hid, out_pad) slab.
    hid = p["mean1_w"].shape[1]
    n_cont = p["mean2_w"].shape[1]
    n_out = 2 * n_cont + 3
    assert n_out <= out_pad
    w2 = jnp.zeros((3 * hid, out_pad), jnp.float32)
    w2 = w2.at[0 * hid:1 * hid, 0:n_cont].set(p["mean2_w"])
    w2 = w2.at[1 * hid:2 * hid, n_cont:2 * n_cont].set(p["ls2_w"])
    w2 = w2.at[2 * hid:3 * hid, 2 * n_cont:n_out].set(p["bin2_w"])
    q["head2_w"] = w2
    # forward_bias fold: binary_logits[:, 0] += forward_bias  (exact).
    bin_b = p["bin2_b"].at[0].add(p["forward_bias"])
    b2 = jnp.zeros((out_pad,), jnp.float32)
    b2 = b2.at[0:n_cont].set(p["mean2_b"])
    b2 = b2.at[n_cont:2 * n_cont].set(p["ls2_b"])
    b2 = b2.at[2 * n_cont:n_out].set(bin_b)
    q["head2_b"] = b2.reshape(1, out_pad)
    return q


# ----------------------------------------------------------------------------
# Forward pass (ActorNet.forward)
# ----------------------------------------------------------------------------
def actor_net_forward(qparams, state_nchw, n_cont):
    # state is NCHW (PyTorch convention); go NHWC once at the top, stay NHWC after.
    x = jnp.transpose(state_nchw, (0, 2, 3, 1))
    x = conv2d_relu_nhwc(x, qparams["conv1_w"], qparams["conv1_b"], 8, 8, 4)
    x = conv2d_relu_nhwc(x, qparams["conv2_w"], qparams["conv2_b"], 4, 4, 2)
    x = conv2d_relu_nhwc(x, qparams["conv3_w"], qparams["conv3_b"], 3, 3, 1)

    N = x.shape[0]
    flat = x.reshape(N, -1)   # NHWC flatten; fc_w input axis was permuted to match

    packed = fused_fc_heads(flat, qparams, n_cont)     # (N, 128) lane-dense slab
    mean = packed[:, 0:n_cont]
    std = packed[:, n_cont:2 * n_cont]
    binary_logits = packed[:, 2 * n_cont:2 * n_cont + 3]
    return mean, std, binary_logits


# ----------------------------------------------------------------------------
# Pure-JAX reference (mirrors the PyTorch module) for a correctness check.
# ----------------------------------------------------------------------------
def reference_forward(p, state):
    x = state
    for name, stride in (("conv1", 4), ("conv2", 2), ("conv3", 1)):
        x = jax.lax.conv_general_dilated(
            x, p[f"{name}_w"], window_strides=(stride, stride), padding="VALID",
            dimension_numbers=("NCHW", "OIHW", "NCHW"))
        x = jnp.maximum(x + p[f"{name}_b"][None, :, None, None], 0.0)
    flat = x.reshape(x.shape[0], -1)
    h = jnp.maximum(flat @ p["fc_w"] + p["fc_b"], 0.0)
    mean = (h @ p["mean1_w"] + p["mean1_b"]) @ p["mean2_w"] + p["mean2_b"]
    log_std = (h @ p["ls1_w"] + p["ls1_b"]) @ p["ls2_w"] + p["ls2_b"]
    std = jnp.exp(jnp.clip(log_std, -20.0, 2.0))
    logits = (h @ p["bin1_w"] + p["bin1_b"]) @ p["bin2_w"] + p["bin2_b"]
    logits = logits.at[:, 0].add(p["forward_bias"])
    return mean, std, logits


if __name__ == "__main__":
    # Small shapes consistent with the module: 4 input channels; spatial 40 is the
    # smallest-ish size that survives the (8/4, 4/2, 3/1) conv stack.
    batch, channels, spatial = 2, 4, 40
    action_dim = 5
    n_cont = action_dim - 3

    # conv output sizes -> flattened_size (same arithmetic as _get_conv_output)
    h1 = (spatial - 8) // 4 + 1
    h2 = (h1 - 4) // 2 + 1
    h3 = (h2 - 3) // 1 + 1
    flattened_size = 128 * h3 * h3

    key = jax.random.PRNGKey(0)
    pkey, xkey = jax.random.split(key)
    params = init_params(pkey, channels, flattened_size, action_dim)
    qparams = prep_params(params, (h3, h3))
    state = jax.random.normal(xkey, (batch, channels, spatial, spatial), jnp.float32)

    fwd = jax.jit(functools.partial(actor_net_forward, n_cont=n_cont))
    mean, std, binary_logits = fwd(qparams, state)
    jax.block_until_ready((mean, std, binary_logits))

    assert mean.shape == (batch, n_cont)
    assert std.shape == (batch, n_cont)
    assert binary_logits.shape == (batch, 3)
    assert bool(jnp.all(std > 0.0))

    # Correctness check against a pure-JAX reference of the PyTorch module.
    r_mean, r_std, r_logits = reference_forward(params, state)
    tol = dict(atol=5e-3, rtol=5e-3)
    assert bool(jnp.allclose(mean, r_mean, **tol))
    assert bool(jnp.allclose(std, r_std, **tol))
    assert bool(jnp.allclose(binary_logits, r_logits, **tol))

    print("KERNEL_OK")
</pallas_src>

<mosaic_0001>
module attributes {stable_mosaic.version = 11 : i64} {
  func.func @_matmul_bias_relu_kernel(%arg0: memref<162x256xf32, #tpu.memory_space<vmem>>, %arg1: memref<256x32xf32, #tpu.memory_space<vmem>>, %arg2: memref<1x32xf32, #tpu.memory_space<vmem>>, %arg3: memref<162x32xf32, #tpu.memory_space<vmem>>) attributes {dimension_semantics = [], scalar_prefetch = 0 : i64, scratch_operands = 0 : i64, tpu.core_type = #tpu.core_type<tc>} {
    %c0 = arith.constant 0 : index
    %c0_0 = arith.constant 0 : index
    %0 = vector.load %arg0[%c0, %c0_0] : memref<162x256xf32, #tpu.memory_space<vmem>>, vector<162x256xf32>
    %c0_1 = arith.constant 0 : index
    %c0_2 = arith.constant 0 : index
    %1 = vector.load %arg1[%c0_1, %c0_2] : memref<256x32xf32, #tpu.memory_space<vmem>>, vector<256x32xf32>
    %cst = arith.constant dense<0.000000e+00> : vector<162x32xf32>
    %2 = tpu.matmul %0, %1, %cst {dimension_numbers = #tpu.dot_dimension_numbers<[1], [0], [0], [1], [0, 0, 1, 1], [], []>} : vector<162x256xf32>, vector<256x32xf32>, vector<162x32xf32> -> vector<162x32xf32>
    %c0_3 = arith.constant 0 : index
    %c0_4 = arith.constant 0 : index
    %3 = vector.load %arg2[%c0_3, %c0_4] : memref<1x32xf32, #tpu.memory_space<vmem>>, vector<1x32xf32>
    %4 = vector.broadcast %3 : vector<1x32xf32> to vector<162x32xf32>
    %5 = arith.addf %2, %4 : vector<162x32xf32>
    %cst_5 = arith.constant 0.000000e+00 : f32
    %6 = vector.broadcast %cst_5 : f32 to vector<162x32xf32>
    %7 = arith.maximumf %5, %6 : vector<162x32xf32>
    %c0_6 = arith.constant 0 : index
    %c0_7 = arith.constant 0 : index
    %8 = vector.load %arg3[%c0_6, %c0_7] : memref<162x32xf32, #tpu.memory_space<vmem>>, vector<162x32xf32>
    tpu.vector_store %arg3[%c0_6, %c0_7], %7 {strides = array<i32>} : memref<162x32xf32, #tpu.memory_space<vmem>>, vector<162x32xf32>,
    return
  }
}

module attributes {stable_mosaic.version = 11 : i64} {
  func.func @_matmul_bias_relu_kernel(%arg0: memref<18x512xf32, #tpu.memory_space<vmem>>, %arg1: memref<512x64xf32, #tpu.memory_space<vmem>>, %arg2: memref<1x64xf32, #tpu.memory_space<vmem>>, %arg3: memref<18x64xf32, #tpu.memory_space<vmem>>) attributes {dimension_semantics = [], scalar_prefetch = 0 : i64, scratch_operands = 0 : i64, tpu.core_type = #tpu.core_type<tc>} {
    %c0 = arith.constant 0 : index
    %c0_0 = arith.constant 0 : index
    %0 = vector.load %arg0[%c0, %c0_0] : memref<18x512xf32, #tpu.memory_space<vmem>>, vector<18x512xf32>
    %c0_1 = arith.constant 0 : index
    %c0_2 = arith.constant 0 : index
    %1 = vector.load %arg1[%c0_1, %c0_2] : memref<512x64xf32, #tpu.memory_space<vmem>>, vector<512x64xf32>
    %cst = arith.constant dense<0.000000e+00> : vector<18x64xf32>
    %2 = tpu.matmul %0, %1, %cst {dimension_numbers = #tpu.dot_dimension_numbers<[1], [0], [0], [1], [0, 0, 1, 1], [], []>} : vector<18x512xf32>, vector<512x64xf32>, vector<18x64xf32> -> vector<18x64xf32>
    %c0_3 = arith.constant 0 : index
    %c0_4 = arith.constant 0 : index
    %3 = vector.load %arg2[%c0_3, %c0_4] : memref<1x64xf32, #tpu.memory_space<vmem>>, vector<1x64xf32>
    %4 = vector.broadcast %3 : vector<1x64xf32> to vector<18x64xf32>
    %5 = arith.addf %2, %4 : vector<18x64xf32>
    %cst_5 = arith.constant 0.000000e+00 : f32
    %6 = vector.broadcast %cst_5 : f32 to vector<18x64xf32>
    %7 = arith.maximumf %5, %6 : vector<18x64xf32>
    %c0_6 = arith.constant 0 : index
    %c0_7 = arith.constant 0 : index
    %8 = vector.load %arg3[%c0_6, %c0_7] : memref<18x64xf32, #tpu.memory_space<vmem>>, vector<18x64xf32>
    tpu.vector_store %arg3[%c0_6, %c0_7], %7 {strides = array<i32>} : memref<18x64xf32, #tpu.memory_space<vmem>>, vector<18x64xf32>,
    return
  }
}

module attributes {stable_mosaic.version = 11 : i64} {
  func.func @_matmul_bias_relu_kernel(%arg0: memref<2x576xf32, #tpu.memory_space<vmem>>, %arg1: memref<576x128xf32, #tpu.memory_space<vmem>>, %arg2: memref<1x128xf32, #tpu.memory_space<vmem>>, %arg3: memref<2x128xf32, #tpu.memory_space<vmem>>) attributes {dimension_semantics = [], scalar_prefetch = 0 : i64, scratch_operands = 0 : i64, tpu.core_type = #tpu.core_type<tc>} {
    %c0 = arith.constant 0 : index
    %c0_0 = arith.constant 0 : index
    %0 = vector.load %arg0[%c0, %c0_0] : memref<2x576xf32, #tpu.memory_space<vmem>>, vector<2x576xf32>
    %c0_1 = arith.constant 0 : index
    %c0_2 = arith.constant 0 : index
    %1 = vector.load %arg1[%c0_1, %c0_2] : memref<576x128xf32, #tpu.memory_space<vmem>>, vector<576x128xf32>
    %cst = arith.constant dense<0.000000e+00> : vector<2x128xf32>
    %2 = tpu.matmul %0, %1, %cst {dimension_numbers = #tpu.dot_dimension_numbers<[1], [0], [0], [1], [0, 0, 1, 1], [], []>} : vector<2x576xf32>, vector<576x128xf32>, vector<2x128xf32> -> vector<2x128xf32>
    %c0_3 = arith.constant 0 : index
    %c0_4 = arith.constant 0 : index
    %3 = vector.load %arg2[%c0_3, %c0_4] : memref<1x128xf32, #tpu.memory_space<vmem>>, vector<1x128xf32>
    %4 = vector.broadcast %3 : vector<1x128xf32> to vector<2x128xf32>
    %5 = arith.addf %2, %4 : vector<2x128xf32>
    %cst_5 = arith.constant 0.000000e+00 : f32
    %6 = vector.broadcast %cst_5 : f32 to vector<2x128xf32>
    %7 = arith.maximumf %5, %6 : vector<2x128xf32>
    %c0_6 = arith.constant 0 : index
    %c0_7 = arith.constant 0 : index
    %8 = vector.load %arg3[%c0_6, %c0_7] : memref<2x128xf32, #tpu.memory_space<vmem>>, vector<2x128xf32>
    tpu.vector_store %arg3[%c0_6, %c0_7], %7 {strides = array<i32>} : memref<2x128xf32, #tpu.memory_space<vmem>>, vector<2x128xf32>,
    return
  }
}

module attributes {stable_mosaic.version = 11 : i64} {
  func.func @kernel(%arg0: memref<2x128xf32, #tpu.memory_space<vmem>>, %arg1: memref<128x512xf32, #tpu.memory_space<vmem>>, %arg2: memref<1x512xf32, #tpu.memory_space<vmem>>, %arg3: memref<512x768xf32, #tpu.memory_space<vmem>>, %arg4: memref<1x768xf32, #tpu.memory_space<vmem>>, %arg5: memref<768x128xf32, #tpu.memory_space<vmem>>, %arg6: memref<1x128xf32, #tpu.memory_space<vmem>>, %arg7: memref<2x128xf32, #tpu.memory_space<vmem>>) attributes {dimension_semantics = [], scalar_prefetch = 0 : i64, scratch_operands = 0 : i64, tpu.core_type = #tpu.core_type<tc>} {
    %c0 = arith.constant 0 : index
    %c0_0 = arith.constant 0 : index
    %0 = vector.load %arg0[%c0, %c0_0] : memref<2x128xf32, #tpu.memory_space<vmem>>, vector<2x128xf32>
    %c0_1 = arith.constant 0 : index
    %c0_2 = arith.constant 0 : index
    %1 = vector.load %arg1[%c0_1, %c0_2] : memref<128x512xf32, #tpu.memory_space<vmem>>, vector<128x512xf32>
    %cst = arith.constant dense<0.000000e+00> : vector<2x512xf32>
    %2 = tpu.matmul %0, %1, %cst {dimension_numbers = #tpu.dot_dimension_numbers<[1], [0], [0], [1], [0, 0, 1, 1], [], []>} : vector<2x128xf32>, vector<128x512xf32>, vector<2x512xf32> -> vector<2x512xf32>
    %c0_3 = arith.constant 0 : index
    %c0_4 = arith.constant 0 : index
    %3 = vector.load %arg2[%c0_3, %c0_4] : memref<1x512xf32, #tpu.memory_space<vmem>>, vector<1x512xf32>
    %4 = vector.broadcast %3 : vector<1x512xf32> to vector<2x512xf32>
    %5 = arith.addf %2, %4 : vector<2x512xf32>
    %cst_5 = arith.constant 0.000000e+00 : f32
    %6 = vector.broadcast %cst_5 : f32 to vector<2x512xf32>
    %7 = arith.maximumf %5, %6 : vector<2x512xf32>
    %c0_6 = arith.constant 0 : index
    %c0_7 = arith.constant 0 : index
    %8 = vector.load %arg3[%c0_6, %c0_7] : memref<512x768xf32, #tpu.memory_space<vmem>>, vector<512x768xf32>
    %cst_8 = arith.constant dense<0.000000e+00> : vector<2x768xf32>
    %9 = tpu.matmul %7, %8, %cst_8 {dimension_numbers = #tpu.dot_dimension_numbers<[1], [0], [0], [1], [0, 0, 1, 1], [], []>} : vector<2x512xf32>, vector<512x768xf32>, vector<2x768xf32> -> vector<2x768xf32>
    %c0_9 = arith.constant 0 : index
    %c0_10 = arith.constant 0 : index
    %10 = vector.load %arg4[%c0_9, %c0_10] : memref<1x768xf32, #tpu.memory_space<vmem>>, vector<1x768xf32>
    %11 = vector.broadcast %10 : vector<1x768xf32> to vector<2x768xf32>
    %12 = arith.addf %9, %11 : vector<2x768xf32>
    %c0_11 = arith.constant 0 : index
    %c0_12 = arith.constant 0 : index
    %13 = vector.load %arg5[%c0_11, %c0_12] : memref<768x128xf32, #tpu.memory_space<vmem>>, vector<768x128xf32>
    %cst_13 = arith.constant dense<0.000000e+00> : vector<2x128xf32>
    %14 = tpu.matmul %12, %13, %cst_13 {dimension_numbers = #tpu.dot_dimension_numbers<[1], [0], [0], [1], [0, 0, 1, 1], [], []>} : vector<2x768xf32>, vector<768x128xf32>, vector<2x128xf32> -> vector<2x128xf32>
    %c0_14 = arith.constant 0 : index
    %c0_15 = arith.constant 0 : index
    %15 = vector.load %arg6[%c0_14, %c0_15] : memref<1x128xf32, #tpu.memory_space<vmem>>, vector<1x128xf32>
    %16 = vector.broadcast %15 : vector<1x128xf32> to vector<2x128xf32>
    %17 = arith.addf %14, %16 : vector<2x128xf32>
    %18 = tpu.iota {dimensions = array<i32: 1>} : vector<2x128xi32>
    %c2_i32 = arith.constant 2 : i32
    %19 = vector.broadcast %c2_i32 : i32 to vector<2x128xi32>
    %20 = arith.cmpi sge, %18, %19 : vector<2x128xi32>
    %c4_i32 = arith.constant 4 : i32
    %21 = vector.broadcast %c4_i32 : i32 to vector<2x128xi32>
    %22 = arith.cmpi slt, %18, %21 : vector<2x128xi32>
    %23 = arith.andi %20, %22 : vector<2x128xi1>
    %cst_16 = arith.constant -2.000000e+01 : f32
    %cst_17 = arith.constant 2.000000e+00 : f32
    %24 = vector.broadcast %cst_16 : f32 to vector<2x128xf32>
    %25 = arith.maximumf %24, %17 : vector<2x128xf32>
    %26 = vector.broadcast %cst_17 : f32 to vector<2x128xf32>
    %27 = arith.minimumf %26, %25 : vector<2x128xf32>
    %28 = math.exp %27 : vector<2x128xf32>
    %29 = arith.select %23, %28, %17 : vector<2x128xi1>, vector<2x128xf32>
    %c0_18 = arith.constant 0 : index
    %c0_19 = arith.constant 0 : index
    %30 = vector.load %arg7[%c0_18, %c0_19] : memref<2x128xf32, #tpu.memory_space<vmem>>, vector<2x128xf32>
    tpu.vector_store %arg7[%c0_18, %c0_19], %29 {strides = array<i32>} : memref<2x128xf32, #tpu.memory_space<vmem>>, vector<2x128xf32>,
    return
  }
}

</mosaic_0001>

<llo_original>
// kernel: actor_net_forward.4
$region0: #{actor_net_forward.4}
  #allocation0 [shape = 'u32[]', space=smem, size = 0x4, offset = 0x4, fixed_abs, tag = 'smem constant byte address 0x4 - core index']
  #allocation1 [shape = 'u32[144,128]{1,0:T(1,128)}', space=vmem, size = 0x12000, scoped, tag = 'internal scratch']
  %s0 = inlined_call_operand.vmem [shape: f32[162,256], index: 0, kind: input, shape index: {}]
  %s1 = inlined_call_operand.vmem [shape: f32[256,32], index: 1, kind: input, shape index: {}]
  %s2 = inlined_call_operand.vmem [shape: f32[1,32], index: 2, kind: input, shape index: {}]
  %s3 = inlined_call_operand.vmem [shape: f32[162,32], index: 3, kind: output, shape index: {}]
  %s4 = sld [smem:[#allocation0]]
  $region22: #{actor_net_forward.4} parent=0
    _
  %s6 = ssub.s32 1, %s4
  %s7 = scalar_select 0, %s6, %s4
  // Predicated region
  $region2: #{actor_net_forward.4} parent=0 // pred_check
    _
  $region3: #{actor_net_forward.4} parent=0 // pred_check_branch
    %9 = sbr.rel (0) target = $region5
  $region4: #{actor_net_forward.4} parent=0 // pred_region
    _
  $region5: #{actor_net_forward.4} parent=0 // pred_fallthru
    _
  // Predicated region
  $region6: #{actor_net_forward.4} parent=0 // pred_check
    _
  $region7: #{actor_net_forward.4} parent=0 // pred_check_branch
    %11 = sbr.rel (0) target = $region9
  $region8: #{actor_net_forward.4} parent=0 // pred_region
    _
  $region9: #{actor_net_forward.4} parent=0 // pred_fallthru
    _
  // Predicated region
  $region10: #{actor_net_forward.4} parent=0 // pred_check
    _
  $region11: #{actor_net_forward.4} parent=0 // pred_check_branch
    %13 = sbr.rel (0) target = $region13
  $region12: #{actor_net_forward.4} parent=0 // pred_region
    _
  $region13: #{actor_net_forward.4} parent=0 // pred_fallthru
    _
  %v14 = vld [vmem:[%s0] sm:$0xff]
  %v15 = vld [vmem:[%s0 + $0x8] sm:$0xff]
  %v16 = vld [vmem:[%s0 + $0x10] sm:$0xff]
  %v17 = vld [vmem:[%s0 + $0x18] sm:$0xff]
  %v18 = vld [vmem:[%s0 + $0x20] sm:$0xff]
  %v19 = vld [vmem:[%s0 + $0x28] sm:$0xff]
  %v20 = vld [vmem:[%s0 + $0x30] sm:$0xff]
  %v21 = vld [vmem:[%s0 + $0x38] sm:$0xff]
  %v22 = vld [vmem:[%s0 + $0x40] sm:$0xff]
  %v23 = vld [vmem:[%s0 + $0x48] sm:$0xff]
  %v24 = vld [vmem:[%s0 + $0x50] sm:$0xff]
  %v25 = vld [vmem:[%s0 + $0x58] sm:$0xff]
  %v26 = vld [vmem:[%s0 + $0x60] sm:$0xff]
  %v27 = vld [vmem:[%s0 + $0x68] sm:$0xff]
  %v28 = vld [vmem:[%s0 + $0x70] sm:$0xff]
  %v29 = vld [vmem:[%s0 + $0x78] sm:$0xff]
  %v30 = vld [vmem:[%s0 + $0x80] sm:$0xff]
  %v31 = vld [vmem:[%s0 + $0x88] sm:$0xff]
  %v32 = vld [vmem:[%s0 + $0x90] sm:$0xff]
  %v33 = vld [vmem:[%s0 + $0x98] sm:$0xff]
  %v34 = vld [vmem:[%s0 + $0xa0] sm:$0xff]
  %v35 = vld [vmem:[%s0 + $0xa8] sm:$0xff]
  %v36 = vld [vmem:[%s0 + $0xb0] sm:$0xff]
  %v37 = vld [vmem:[%s0 + $0xb8] sm:$0xff]
  %v38 = vld [vmem:[%s0 + $0xc0] sm:$0xff]
  %v39 = vld [vmem:[%s0 + $0xc8] sm:$0xff]
  %v40 = vld [vmem:[%s0 + $0xd0] sm:$0xff]
  %v41 = vld [vmem:[%s0 + $0xd8] sm:$0xff]
  %v42 = vld [vmem:[%s0 + $0xe0] sm:$0xff]
  %v43 = vld [vmem:[%s0 + $0xe8] sm:$0xff]
  %v44 = vld [vmem:[%s0 + $0xf0] sm:$0xff]
  %v45 = vld [vmem:[%s0 + $0xf8] sm:$0xff]
  %v46 = vld [vmem:[%s0 + $0x100] sm:$0xff]
  %v47 = vld [vmem:[%s0 + $0x108] sm:$0xff]
  %v48 = vld [vmem:[%s0 + $0x110] sm:$0xff]
  %v49 = vld [vmem:[%s0 + $0x118] sm:$0xff]
  %v50 = vld [vmem:[%s0 + $0x120] sm:$0xff]
  %v51 = vld [vmem:[%s0 + $0x128] sm:$0xff]
  %v52 = vld [vmem:[%s0 + $0x130] sm:$0xff]
  %v53 = vld [vmem:[%s0 + $0x138] sm:$0xff]
  %v54 = vld [vmem:[%s0 + $0x140] sm:$0x3]
  %v55 = vld [vmem:[%s0 + $0x148] sm:$0x3]
  %v56 = vld [vmem:[%s1] sm:$0xff]
  %v57 = vld [vmem:[%s1 + $0x8] sm:$0xff]
  %v58 = vld [vmem:[%s1 + $0x10] sm:$0xff]
  %v59 = vld [vmem:[%s1 + $0x18] sm:$0xff]
  %v60 = vld [vmem:[%s1 + $0x20] sm:$0xff]
  %v61 = vld [vmem:[%s1 + $0x28] sm:$0xff]
  %v62 = vld [vmem:[%s1 + $0x30] sm:$0xff]
  %v63 = vld [vmem:[%s1 + $0x38] sm:$0xff]
  %v64 = vld [vmem:[%s1 + $0x40] sm:$0xff]
  %v65 = vld [vmem:[%s1 + $0x48] sm:$0xff]
  %v66 = vld [vmem:[%s1 + $0x50] sm:$0xff]
  %v67 = vld [vmem:[%s1 + $0x58] sm:$0xff]
  %v68 = vld [vmem:[%s1 + $0x60] sm:$0xff]
  %v69 = vld [vmem:[%s1 + $0x68] sm:$0xff]
  %v70 = vld [vmem:[%s1 + $0x70] sm:$0xff]
  %v71 = vld [vmem:[%s1 + $0x78] sm:$0xff]
  %v72 = vld [vmem:[%s1 + $0x80] sm:$0xff]
  %v73 = vld [vmem:[%s1 + $0x88] sm:$0xff]
  %v74 = vld [vmem:[%s1 + $0x90] sm:$0xff]
  %v75 = vld [vmem:[%s1 + $0x98] sm:$0xff]
  %v76 = vld [vmem:[%s1 + $0xa0] sm:$0xff]
  %v77 = vld [vmem:[%s1 + $0xa8] sm:$0xff]
  %v78 = vld [vmem:[%s1 + $0xb0] sm:$0xff]
  %v79 = vld [vmem:[%s1 + $0xb8] sm:$0xff]
  %v80 = vld [vmem:[%s1 + $0xc0] sm:$0xff]
  %v81 = vld [vmem:[%s1 + $0xc8] sm:$0xff]
  %v82 = vld [vmem:[%s1 + $0xd0] sm:$0xff]
  %v83 = vld [vmem:[%s1 + $0xd8] sm:$0xff]
  %v84 = vld [vmem:[%s1 + $0xe0] sm:$0xff]
  %v85 = vld [vmem:[%s1 + $0xe8] sm:$0xff]
  %v86 = vld [vmem:[%s1 + $0xf0] sm:$0xff]
  %v87 = vld [vmem:[%s1 + $0xf8] sm:$0xff]
  %v88 = vld [vmem:[%s2] sm:$0x1]
  %v90 = vlaneseq
  %v91 = vshrl.u32 %v90, 7
  %v92 = vsub.s32 0, %v91
  %v93 = vrot.slane %v88, %v92
  %95 = vmatprep.subr.mxu0 0.0
  %96 = vmatpush1.msra.mxu0 %v56
  %97 = vmatprep.subr.mxu0 0.0
  %98 = vmatpush1.msra.mxu0 %v57
  %99 = vmatprep.subr.mxu0 0.0
  %100 = vmatpush1.msra.mxu0 %v58
  %101 = vmatprep.subr.mxu0 0.0
  %102 = vmatpush1.msra.mxu0 %v59
  %103 = vmatprep.subr.mxu0 0.0
  %104 = vmatpush1.msra.mxu0 %v60
  %105 = vmatprep.subr.mxu0 0.0
  %106 = vmatpush1.msra.mxu0 %v61
  %107 = vmatprep.subr.mxu0 0.0
  %108 = vmatpush1.msra.mxu0 %v62
  %109 = vmatprep.subr.mxu0 0.0
  %110 = vmatpush1.msra.mxu0 %v63
  %111 = vmatprep.subr.mxu0 0.0
  %112 = vmatpush1.msra.mxu0 %v64
  %113 = vmatprep.subr.mxu0 0.0
  %114 = vmatpush1.msra.mxu0 %v65
  %115 = vmatprep.subr.mxu0 0.0
  %116 = vmatpush1.msra.mxu0 %v66
  %117 = vmatprep.subr.mxu0 0.0
  %118 = vmatpush1.msra.mxu0 %v67
  %119 = vmatprep.subr.mxu0 0.0
  %120 = vmatpush1.msra.mxu0 %v68
  %121 = vmatprep.subr.mxu0 0.0
  %122 = vmatpush1.msra.mxu0 %v69
  %123 = vmatprep.subr.mxu0 0.0
  %124 = vmatpush1.msra.mxu0 %v70
  %125 = vmatprep.subr.mxu0 0.0
  %126 = vmatpush1.msra.mxu0 %v71
  %127 = vmatprep.subr.mxu0 0.0
  %128 = vmatpush1.msra.mxu0 %v72
  %129 = vmatprep.subr.mxu0 0.0
  %130 = vmatpush1.msra.mxu0 %v73
  %131 = vmatprep.subr.mxu0 0.0
  %132 = vmatpush1.msra.mxu0 %v74
  %133 = vmatprep.subr.mxu0 0.0
  %134 = vmatpush1.msra.mxu0 %v75
  %135 = vmatprep.subr.mxu0 0.0
  %136 = vmatpush1.msra.mxu0 %v76
  %137 = vmatprep.subr.mxu0 0.0
  %138 = vmatpush1.msra.mxu0 %v77
  %139 = vmatprep.subr.mxu0 0.0
  %140 = vmatpush1.msra.mxu0 %v78
  %141 = vmatprep.subr.mxu0 0.0
  %142 = vmatpush1.msra.mxu0 %v79
  %143 = vmatprep.subr.mxu0 0.0
  %144 = vmatpush1.msra.mxu0 %v80
  %145 = vmatprep.subr.mxu0 0.0
  %146 = vmatpush1.msra.mxu0 %v81
  %147 = vmatprep.subr.mxu0 0.0
  %148 = vmatpush1.msra.mxu0 %v82
  %149 = vmatprep.subr.mxu0 0.0
  %150 = vmatpush1.msra.mxu0 %v83
  %151 = vmatprep.subr.mxu0 0.0
  %152 = vmatpush1.msra.mxu0 %v84
  %153 = vmatprep.subr.mxu0 0.0
  %154 = vmatpush1.msra.mxu0 %v85
  %155 = vmatprep.subr.mxu0 0.0
  %156 = vmatpush1.msra.mxu0 %v86
  %157 = vmatprep.subr.mxu0 0.0
  %158 = vmatpush1.msra.mxu0 %v87
  %159 = vmatprep.mubr.f32.mxu0 %v15
  %160 = vmatmul.mubr.f32.gmra.mrb[0].mxu0 %v14
  %v161 = vpop.f32.mrb[0].mxu0
  %v162 = vadd.f32 %v93, %v161
  %v163 = vpop.f32.mrb[0].mxu0
  %164 = vmatprep.mubr.f32.mxu0 %v17
  %165 = vmatmul.mubr.f32.gmra.mrb[0].mxu0 %v16
  %v166 = vpop.f32.mrb[0].mxu0
  %v167 = vadd.f32 %v93, %v166
  %v168 = vpop.f32.mrb[0].mxu0
  %169 = vmatprep.mubr.f32.mxu0 %v19
  %170 = vmatmul.mubr.f32.gmra.mrb[0].mxu0 %v18
  %v171 = vpop.f32.mrb[0].mxu0
  %v172 = vadd.f32 %v93, %v171
  %v173 = vpop.f32.mrb[0].mxu0
  %174 = vmatprep.mubr.f32.mxu0 %v21
  %175 = vmatmul.mubr.f32.gmra.mrb[0].mxu0 %v20
  %v176 = vpop.f32.mrb[0].mxu0
  %v177 = vadd.f32 %v93, %v176
  %v178 = vpop.f32.mrb[0].mxu0
  %179 = vmatprep.mubr.f32.mxu0 %v23
  %180 = vmatmul.mubr.f32.gmra.mrb[0].mxu0 %v22
  %v181 = vpop.f32.mrb[0].mxu0
  %v182 = vadd.f32 %v93, %v181
  %v183 = vpop.f32.mrb[0].mxu0
  %184 = vmatprep.mubr.f32.mxu0 %v25
  %185 = vmatmul.mubr.f32.gmra.mrb[0].mxu0 %v24
  %v186 = vpop.f32.mrb[0].mxu0
  %v187 = vadd.f32 %v93, %v186
  %v188 = vpop.f32.mrb[0].mxu0
  %189 = vmatprep.mubr.f32.mxu0 %v27
  %190 = vmatmul.mubr.f32.gmra.mrb[0].mxu0 %v26
  %v191 = vpop.f32.mrb[0].mxu0
  %v192 = vadd.f32 %v93, %v191
  %v193 = vpop.f32.mrb[0].mxu0
  %194 = vmatprep.mubr.f32.mxu0 %v29
  %195 = vmatmul.mubr.f32.gmra.mrb[0].mxu0 %v28
  %v196 = vpop.f32.mrb[0].mxu0
  %v197 = vadd.f32 %v93, %v196
  %v198 = vpop.f32.mrb[0].mxu0
  %199 = vmatprep.mubr.f32.mxu0 %v31
  %200 = vmatmul.mubr.f32.gmra.mrb[0].mxu0 %v30
  %v201 = vpop.f32.mrb[0].mxu0
  %v202 = vadd.f32 %v93, %v201
  %v203 = vpop.f32.mrb[0].mxu0
  %204 = vmatprep.mubr.f32.mxu0 %v33
  %205 = vmatmul.mubr.f32.gmra.mrb[0].mxu0 %v32
  %v206 = vpop.f32.mrb[0].mxu0
  %v207 = vadd.f32 %v93, %v206
  %v208 = vpop.f32.mrb[0].mxu0
  %209 = vmatprep.mubr.f32.mxu0 %v35
  %210 = vmatmul.mubr.f32.gmra.mrb[0].mxu0 %v34
  %v211 = vpop.f32.mrb[0].mxu0
  %v212 = vadd.f32 %v93, %v211
  %v213 = vpop.f32.mrb[0].mxu0
  %214 = vmatprep.mubr.f32.mxu0 %v37
  %215 = vmatmul.mubr.f32.gmra.mrb[0].mxu0 %v36
  %v216 = vpop.f32.mrb[0].mxu0
  %v217 = vadd.f32 %v93, %v216
  %v218 = vpop.f32.mrb[0].mxu0
  %219 = vmatprep.mubr.f32.mxu0 %v39
  %220 = vmatmul.mubr.f32.gmra.mrb[0].mxu0 %v38
  %v221 = vpop.f32.mrb[0].mxu0
  %v222 = vadd.f32 %v93, %v221
  %v223 = vpop.f32.mrb[0].mxu0
  %224 = vmatprep.mubr.f32.mxu0 %v41
  %225 = vmatmul.mubr.f32.gmra.mrb[0].mxu0 %v40
  %v226 = vpop.f32.mrb[0].mxu0
  %v227 = vadd.f32 %v93, %v226
  %v228 = vpop.f32.mrb[0].mxu0
  %229 = vmatprep.mubr.f32.mxu0 %v43
  %230 = vmatmul.mubr.f32.gmra.mrb[0].mxu0 %v42
  %v231 = vpop.f32.mrb[0].mxu0
  %v232 = vadd.f32 %v93, %v231
  %v233 = vpop.f32.mrb[0].mxu0
  %234 = vmatprep.mubr.f32.mxu0 %v45
  %235 = vmatmul.mubr.f32.gmra.mrb[0].mxu0 %v44
  %v236 = vpop.f32.mrb[0].mxu0
  %v237 = vadd.f32 %v93, %v236
  %v238 = vpop.f32.mrb[0].mxu0
  %239 = vmatprep.mubr.f32.mxu0 %v47
  %240 = vmatmul.mubr.f32.gmra.mrb[0].mxu0 %v46
  %v241 = vpop.f32.mrb[0].mxu0
  %v242 = vadd.f32 %v93, %v241
  %v243 = vpop.f32.mrb[0].mxu0
  %244 = vmatprep.mubr.f32.mxu0 %v49
  %245 = vmatmul.mubr.f32.gmra.mrb[0].mxu0 %v48
  %v246 = vpop.f32.mrb[0].mxu0
  %v247 = vadd.f32 %v93, %v246
  %v248 = vpop.f32.mrb[0].mxu0
  %249 = vmatprep.mubr.f32.mxu0 %v51
  %250 = vmatmul.mubr.f32.gmra.mrb[0].mxu0 %v50
  %v251 = vpop.f32.mrb[0].mxu0
  %v252 = vadd.f32 %v93, %v251
  %v253 = vpop.f32.mrb[0].mxu0
  %254 = vmatprep.mubr.f32.mxu0 %v53
  %255 = vmatmul.mubr.f32.gmra.mrb[0].mxu0 %v52
  %v256 = vpop.f32.mrb[0].mxu0
  %v257 = vadd.f32 %v93, %v256
  %v258 = vpop.f32.mrb[0].mxu0
  %259 = vmatprep.mubr.f32.mxu0 %v55
  %260 = vmatmul.mubr.f32.gmra.mrb[0].mxu0 %v54
  %v261 = vpop.f32.mrb[0].mxu0
  %v262 = vadd.f32 %v93, %v261
  %v263 = vpop.f32.mrb[0].mxu0
  %264 = vdwg.mxu0
  %v265 = vmax.f32 %v162, 0.0
  %v266 = vmax.f32 %v167, 0.0
  %v267 = vmax.f32 %v172, 0.0
  %v268 = vmax.f32 %v177, 0.0
  %v269 = vmax.f32 %v182, 0.0
  %v270 = vmax.f32 %v187, 0.0
  %v271 = vmax.f32 %v192, 0.0
  %v272 = vmax.f32 %v197, 0.0
  %v273 = vmax.f32 %v202, 0.0
  %v274 = vmax.f32 %v207, 0.0
  %v275 = vmax.f32 %v212, 0.0
  %v276 = vmax.f32 %v217, 0.0
  %v277 = vmax.f32 %v222, 0.0
  %v278 = vmax.f32 %v227, 0.0
  %v279 = vmax.f32 %v232, 0.0
  %v280 = vmax.f32 %v237, 0.0
  %v281 = vmax.f32 %v242, 0.0
  %v282 = vmax.f32 %v247, 0.0
  %v283 = vmax.f32 %v252, 0.0
  %v284 = vmax.f32 %v257, 0.0
  %v285 = vmax.f32 %v262, 0.0
  %vm286 = vcmask 261120
  %287 = vst.msk [vmem:[%s3] sm:$0xff] %vm286, %v265
  %288 = vst.msk [vmem:[%s3 + $0x8] sm:$0xff] %vm286, %v266
  %289 = vst.msk [vmem:[%s3 + $0x10] sm:$0xff] %vm286, %v267
  %290 = vst.msk [vmem:[%s3 + $0x18] sm:$0xff] %vm286, %v268
  %291 = vst.msk [vmem:[%s3 + $0x20] sm:$0xff] %vm286, %v269
  %292 = vst.msk [vmem:[%s3 + $0x28] sm:$0xff] %vm286, %v270
  %293 = vst.msk [vmem:[%s3 + $0x30] sm:$0xff] %vm286, %v271
  %294 = vst.msk [vmem:[%s3 + $0x38] sm:$0xff] %vm286, %v272
  %295 = vst.msk [vmem:[%s3 + $0x40] sm:$0xff] %vm286, %v273
  %296 = vst.msk [vmem:[%s3 + $0x48] sm:$0xff] %vm286, %v274
  %297 = vst.msk [vmem:[%s3 + $0x50] sm:$0xff] %vm286, %v275
  %298 = vst.msk [vmem:[%s3 + $0x58] sm:$0xff] %vm286, %v276
  %299 = vst.msk [vmem:[%s3 + $0x60] sm:$0xff] %vm286, %v277
  %300 = vst.msk [vmem:[%s3 + $0x68] sm:$0xff] %vm286, %v278
  %301 = vst.msk [vmem:[%s3 + $0x70] sm:$0xff] %vm286, %v279
  %302 = vst.msk [vmem:[%s3 + $0x78] sm:$0xff] %vm286, %v280
  %303 = vst.msk [vmem:[%s3 + $0x80] sm:$0xff] %vm286, %v281
  %304 = vst.msk [vmem:[%s3 + $0x88] sm:$0xff] %vm286, %v282
  %305 = vst.msk [vmem:[%s3 + $0x90] sm:$0xff] %vm286, %v283
  %306 = vst.msk [vmem:[%s3 + $0x98] sm:$0xff] %vm286, %v284
  %vm307 = vcmask 254976
  %308 = vst.msk [vmem:[%s3 + $0xa0] sm:$0x3] %vm307, %v285
  // Predicated region
  $region14: #{actor_net_forward.4} parent=0 // pred_check
    _
  $region15: #{actor_net_forward.4} parent=0 // pred_check_branch
    %310 = sbr.rel (0) target = $region17
  $region16: #{actor_net_forward.4} parent=0 // pred_region
    _
  $region17: #{actor_net_forward.4} parent=0 // pred_fallthru
    _
  // Predicated region
  $region18: #{actor_net_forward.4} parent=0 // pred_check
    _
  $region19: #{actor_net_forward.4} parent=0 // pred_check_branch
    %312 = sbr.rel (0) target = $region21
  $region20: #{actor_net_forward.4} parent=0 // pred_region
    _
  $region21: #{actor_net_forward.4} parent=0 // pred_fallthru
    _

// kernel: actor_net_forward.5
$region0: #{actor_net_forward.5}
  #allocation0 [shape = 'u32[]', space=smem, size = 0x4, offset = 0x4, fixed_abs, tag = 'smem constant byte address 0x4 - core index']
  #allocation1 [shape = 'u32[144,128]{1,0:T(1,128)}', space=vmem, size = 0x12000, scoped, tag = 'internal scratch']
  %s0 = inlined_call_operand.vmem [shape: f32[18,512], index: 0, kind: input, shape index: {}]
  %s1 = inlined_call_operand.vmem [shape: f32[512,64], index: 1, kind: input, shape index: {}]
  %s2 = inlined_call_operand.vmem [shape: f32[1,64], index: 2, kind: input, shape index: {}]
  %s3 = inlined_call_operand.vmem [shape: f32[18,64], index: 3, kind: output, shape index: {}]
  %s4 = sld [smem:[#allocation0]]
  $region22: #{actor_net_forward.5} parent=0
    _
  %s6 = ssub.s32 1, %s4
  %s7 = scalar_select 0, %s6, %s4
  // Predicated region
  $region2: #{actor_net_forward.5} parent=0 // pred_check
    _
  $region3: #{actor_net_forward.5} parent=0 // pred_check_branch
    %9 = sbr.rel (0) target = $region5
  $region4: #{actor_net_forward.5} parent=0 // pred_region
    _
  $region5: #{actor_net_forward.5} parent=0 // pred_fallthru
    _
  // Predicated region
  $region6: #{actor_net_forward.5} parent=0 // pred_check
    _
  $region7: #{actor_net_forward.5} parent=0 // pred_check_branch
    %11 = sbr.rel (0) target = $region9
  $region8: #{actor_net_forward.5} parent=0 // pred_region
    _
  $region9: #{actor_net_forward.5} parent=0 // pred_fallthru
    _
  // Predicated region
  $region10: #{actor_net_forward.5} parent=0 // pred_check
    _
  $region11: #{actor_net_forward.5} parent=0 // pred_check_branch
    %13 = sbr.rel (0) target = $region13
  $region12: #{actor_net_forward.5} parent=0 // pred_region
    _
  $region13: #{actor_net_forward.5} parent=0 // pred_fallthru
    _
  %v14 = vld [vmem:[%s0] sm:$0xff]
  %v15 = vld [vmem:[%s0 + $0x8] sm:$0xff]
  %v16 = vld [vmem:[%s0 + $0x10] sm:$0xff]
  %v17 = vld [vmem:[%s0 + $0x18] sm:$0xff]
  %v18 = vld [vmem:[%s0 + $0x20] sm:$0xff]
  %v19 = vld [vmem:[%s0 + $0x28] sm:$0xff]
  %v20 = vld [vmem:[%s0 + $0x30] sm:$0xff]
  %v21 = vld [vmem:[%s0 + $0x38] sm:$0xff]
  %v22 = vld [vmem:[%s0 + $0x40] sm:$0x3]
  %v23 = vld [vmem:[%s0 + $0x48] sm:$0x3]
  %v24 = vld [vmem:[%s0 + $0x50] sm:$0x3]
  %v25 = vld [vmem:[%s0 + $0x58] sm:$0x3]
  %v26 = vld [vmem:[%s1] sm:$0xff]
  %v27 = vld [vmem:[%s1 + $0x8] sm:$0xff]
  %v28 = vld [vmem:[%s1 + $0x10] sm:$0xff]
  %v29 = vld [vmem:[%s1 + $0x18] sm:$0xff]
  %v30 = vld [vmem:[%s1 + $0x20] sm:$0xff]
  %v31 = vld [vmem:[%s1 + $0x28] sm:$0xff]
  %v32 = vld [vmem:[%s1 + $0x30] sm:$0xff]
  %v33 = vld [vmem:[%s1 + $0x38] sm:$0xff]
  %v34 = vld [vmem:[%s1 + $0x40] sm:$0xff]
  %v35 = vld [vmem:[%s1 + $0x48] sm:$0xff]
  %v36 = vld [vmem:[%s1 + $0x50] sm:$0xff]
  %v37 = vld [vmem:[%s1 + $0x58] sm:$0xff]
  %v38 = vld [vmem:[%s1 + $0x60] sm:$0xff]
  %v39 = vld [vmem:[%s1 + $0x68] sm:$0xff]
  %v40 = vld [vmem:[%s1 + $0x70] sm:$0xff]
  %v41 = vld [vmem:[%s1 + $0x78] sm:$0xff]
  %v42 = vld [vmem:[%s1 + $0x80] sm:$0xff]
  %v43 = vld [vmem:[%s1 + $0x88] sm:$0xff]
  %v44 = vld [vmem:[%s1 + $0x90] sm:$0xff]
  %v45 = vld [vmem:[%s1 + $0x98] sm:$0xff]
  %v46 = vld [vmem:[%s1 + $0xa0] sm:$0xff]
  %v47 = vld [vmem:[%s1 + $0xa8] sm:$0xff]
  %v48 = vld [vmem:[%s1 + $0xb0] sm:$0xff]
  %v49 = vld [vmem:[%s1 + $0xb8] sm:$0xff]
  %v50 = vld [vmem:[%s1 + $0xc0] sm:$0xff]
  %v51 = vld [vmem:[%s1 + $0xc8] sm:$0xff]
  %v52 = vld [vmem:[%s1 + $0xd0] sm:$0xff]
  %v53 = vld [vmem:[%s1 + $0xd8] sm:$0xff]
  %v54 = vld [vmem:[%s1 + $0xe0] sm:$0xff]
  %v55 = vld [vmem:[%s1 + $0xe8] sm:$0xff]
  %v56 = vld [vmem:[%s1 + $0xf0] sm:$0xff]
  %v57 = vld [vmem:[%s1 + $0xf8] sm:$0xff]
  %v58 = vld [vmem:[%s1 + $0x100] sm:$0xff]
  %v59 = vld [vmem:[%s1 + $0x108] sm:$0xff]
  %v60 = vld [vmem:[%s1 + $0x110] sm:$0xff]
  %v61 = vld [vmem:[%s1 + $0x118] sm:$0xff]
  %v62 = vld [vmem:[%s1 + $0x120] sm:$0xff]
  %v63 = vld [vmem:[%s1 + $0x128] sm:$0xff]
  %v64 = vld [vmem:[%s1 + $0x130] sm:$0xff]
  %v65 = vld [vmem:[%s1 + $0x138] sm:$0xff]
  %v66 = vld [vmem:[%s1 + $0x140] sm:$0xff]
  %v67 = vld [vmem:[%s1 + $0x148] sm:$0xff]
  %v68 = vld [vmem:[%s1 + $0x150] sm:$0xff]
  %v69 = vld [vmem:[%s1 + $0x158] sm:$0xff]
  %v70 = vld [vmem:[%s1 + $0x160] sm:$0xff]
  %v71 = vld [vmem:[%s1 + $0x168] sm:$0xff]
  %v72 = vld [vmem:[%s1 + $0x170] sm:$0xff]
  %v73 = vld [vmem:[%s1 + $0x178] sm:$0xff]
  %v74 = vld [vmem:[%s1 + $0x180] sm:$0xff]
  %v75 = vld [vmem:[%s1 + $0x188] sm:$0xff]
  %v76 = vld [vmem:[%s1 + $0x190] sm:$0xff]
  %v77 = vld [vmem:[%s1 + $0x198] sm:$0xff]
  %v78 = vld [vmem:[%s1 + $0x1a0] sm:$0xff]
  %v79 = vld [vmem:[%s1 + $0x1a8] sm:$0xff]
  %v80 = vld [vmem:[%s1 + $0x1b0] sm:$0xff]
  %v81 = vld [vmem:[%s1 + $0x1b8] sm:$0xff]
  %v82 = vld [vmem:[%s1 + $0x1c0] sm:$0xff]
  %v83 = vld [vmem:[%s1 + $0x1c8] sm:$0xff]
  %v84 = vld [vmem:[%s1 + $0x1d0] sm:$0xff]
  %v85 = vld [vmem:[%s1 + $0x1d8] sm:$0xff]
  %v86 = vld [vmem:[%s1 + $0x1e0] sm:$0xff]
  %v87 = vld [vmem:[%s1 + $0x1e8] sm:$0xff]
  %v88 = vld [vmem:[%s1 + $0x1f0] sm:$0xff]
  %v89 = vld [vmem:[%s1 + $0x1f8] sm:$0xff]
  %v90 = vld [vmem:[%s2] sm:$0x1]
  %v92 = vlaneseq
  %v93 = vshrl.u32 %v92, 7
  %v94 = vsub.s32 0, %v93
  %v95 = vrot.slane %v90, %v94
  %97 = vmatprep.subr.mxu0 0.0
  %98 = vmatpush1.msra.mxu0 %v26
  %99 = vmatprep.subr.mxu0 0.0
  %100 = vmatpush1.msra.mxu0 %v27
  %101 = vmatprep.subr.mxu0 0.0
  %102 = vmatpush1.msra.mxu0 %v28
  %103 = vmatprep.subr.mxu0 0.0
  %104 = vmatpush1.msra.mxu0 %v29
  %105 = vmatprep.subr.mxu0 0.0
  %106 = vmatpush1.msra.mxu0 %v30
  %107 = vmatprep.subr.mxu0 0.0
  %108 = vmatpush1.msra.mxu0 %v31
  %109 = vmatprep.subr.mxu0 0.0
  %110 = vmatpush1.msra.mxu0 %v32
  %111 = vmatprep.subr.mxu0 0.0
  %112 = vmatpush1.msra.mxu0 %v33
  %113 = vmatprep.subr.mxu0 0.0
  %114 = vmatpush1.msra.mxu0 %v34
  %115 = vmatprep.subr.mxu0 0.0
  %116 = vmatpush1.msra.mxu0 %v35
  %117 = vmatprep.subr.mxu0 0.0
  %118 = vmatpush1.msra.mxu0 %v36
  %119 = vmatprep.subr.mxu0 0.0
  %120 = vmatpush1.msra.mxu0 %v37
  %121 = vmatprep.subr.mxu0 0.0
  %122 = vmatpush1.msra.mxu0 %v38
  %123 = vmatprep.subr.mxu0 0.0
  %124 = vmatpush1.msra.mxu0 %v39
  %125 = vmatprep.subr.mxu0 0.0
  %126 = vmatpush1.msra.mxu0 %v40
  %127 = vmatprep.subr.mxu0 0.0
  %128 = vmatpush1.msra.mxu0 %v41
  %129 = vmatprep.subr.mxu0 0.0
  %130 = vmatpush1.msra.mxu0 %v42
  %131 = vmatprep.subr.mxu0 0.0
  %132 = vmatpush1.msra.mxu0 %v43
  %133 = vmatprep.subr.mxu0 0.0
  %134 = vmatpush1.msra.mxu0 %v44
  %135 = vmatprep.subr.mxu0 0.0
  %136 = vmatpush1.msra.mxu0 %v45
  %137 = vmatprep.subr.mxu0 0.0
  %138 = vmatpush1.msra.mxu0 %v46
  %139 = vmatprep.subr.mxu0 0.0
  %140 = vmatpush1.msra.mxu0 %v47
  %141 = vmatprep.subr.mxu0 0.0
  %142 = vmatpush1.msra.mxu0 %v48
  %143 = vmatprep.subr.mxu0 0.0
  %144 = vmatpush1.msra.mxu0 %v49
  %145 = vmatprep.subr.mxu0 0.0
  %146 = vmatpush1.msra.mxu0 %v50
  %147 = vmatprep.subr.mxu0 0.0
  %148 = vmatpush1.msra.mxu0 %v51
  %149 = vmatprep.subr.mxu0 0.0
  %150 = vmatpush1.msra.mxu0 %v52
  %151 = vmatprep.subr.mxu0 0.0
  %152 = vmatpush1.msra.mxu0 %v53
  %153 = vmatprep.subr.mxu0 0.0
  %154 = vmatpush1.msra.mxu0 %v54
  %155 = vmatprep.subr.mxu0 0.0
  %156 = vmatpush1.msra.mxu0 %v55
  %157 = vmatprep.subr.mxu0 0.0
  %158 = vmatpush1.msra.mxu0 %v56
  %159 = vmatprep.subr.mxu0 0.0
  %160 = vmatpush1.msra.mxu0 %v57
  %161 = vmatprep.mubr.f32.mxu0 %v15
  %162 = vmatmul.mubr.f32.gmra.mrb[0].mxu0 %v14
  %v163 = vpop.f32.mrb[0].mxu0
  %v164 = vadd.f32 %v95, %v163
  %v165 = vpop.f32.mrb[0].mxu0
  %166 = vmatprep.mubr.f32.mxu0 %v19
  %167 = vmatmul.mubr.f32.gmra.mrb[0].mxu0 %v18
  %v168 = vpop.f32.mrb[0].mxu0
  %v169 = vadd.f32 %v95, %v168
  %v170 = vpop.f32.mrb[0].mxu0
  %171 = vmatprep.mubr.f32.mxu0 %v23
  %172 = vmatmul.mubr.f32.gmra.mrb[0].mxu0 %v22
  %v173 = vpop.f32.mrb[0].mxu0
  %v174 = vadd.f32 %v95, %v173
  %v175 = vpop.f32.mrb[0].mxu0
  %176 = vdwg.mxu0
  %177 = vmatprep.subr.mxu0 0.0
  %178 = vmatpush1.msra.mxu0 %v58
  %179 = vmatprep.subr.mxu0 0.0
  %180 = vmatpush1.msra.mxu0 %v59
  %181 = vmatprep.subr.mxu0 0.0
  %182 = vmatpush1.msra.mxu0 %v60
  %183 = vmatprep.subr.mxu0 0.0
  %184 = vmatpush1.msra.mxu0 %v61
  %185 = vmatprep.subr.mxu0 0.0
  %186 = vmatpush1.msra.mxu0 %v62
  %187 = vmatprep.subr.mxu0 0.0
  %188 = vmatpush1.msra.mxu0 %v63
  %189 = vmatprep.subr.mxu0 0.0
  %190 = vmatpush1.msra.mxu0 %v64
  %191 = vmatprep.subr.mxu0 0.0
  %192 = vmatpush1.msra.mxu0 %v65
  %193 = vmatprep.subr.mxu0 0.0
  %194 = vmatpush1.msra.mxu0 %v66
  %195 = vmatprep.subr.mxu0 0.0
  %196 = vmatpush1.msra.mxu0 %v67
  %197 = vmatprep.subr.mxu0 0.0
  %198 = vmatpush1.msra.mxu0 %v68
  %199 = vmatprep.subr.mxu0 0.0
  %200 = vmatpush1.msra.mxu0 %v69
  %201 = vmatprep.subr.mxu0 0.0
  %202 = vmatpush1.msra.mxu0 %v70
  %203 = vmatprep.subr.mxu0 0.0
  %204 = vmatpush1.msra.mxu0 %v71
  %205 = vmatprep.subr.mxu0 0.0
  %206 = vmatpush1.msra.mxu0 %v72
  %207 = vmatprep.subr.mxu0 0.0
  %208 = vmatpush1.msra.mxu0 %v73
  %209 = vmatprep.subr.mxu0 0.0
  %210 = vmatpush1.msra.mxu0 %v74
  %211 = vmatprep.subr.mxu0 0.0
  %212 = vmatpush1.msra.mxu0 %v75
  %213 = vmatprep.subr.mxu0 0.0
  %214 = vmatpush1.msra.mxu0 %v76
  %215 = vmatprep.subr.mxu0 0.0
  %216 = vmatpush1.msra.mxu0 %v77
  %217 = vmatprep.subr.mxu0 0.0
  %218 = vmatpush1.msra.mxu0 %v78
  %219 = vmatprep.subr.mxu0 0.0
  %220 = vmatpush1.msra.mxu0 %v79
  %221 = vmatprep.subr.mxu0 0.0
  %222 = vmatpush1.msra.mxu0 %v80
  %223 = vmatprep.subr.mxu0 0.0
  %224 = vmatpush1.msra.mxu0 %v81
  %225 = vmatprep.subr.mxu0 0.0
  %226 = vmatpush1.msra.mxu0 %v82
  %227 = vmatprep.subr.mxu0 0.0
  %228 = vmatpush1.msra.mxu0 %v83
  %229 = vmatprep.subr.mxu0 0.0
  %230 = vmatpush1.msra.mxu0 %v84
  %231 = vmatprep.subr.mxu0 0.0
  %232 = vmatpush1.msra.mxu0 %v85
  %233 = vmatprep.subr.mxu0 0.0
  %234 = vmatpush1.msra.mxu0 %v86
  %235 = vmatprep.subr.mxu0 0.0
  %236 = vmatpush1.msra.mxu0 %v87
  %237 = vmatprep.subr.mxu0 0.0
  %238 = vmatpush1.msra.mxu0 %v88
  %239 = vmatprep.subr.mxu0 0.0
  %240 = vmatpush1.msra.mxu0 %v89
  %241 = vmatprep.mubr.f32.mxu0 %v17
  %242 = vmatmul.mubr.f32.gmra.mrb[0].mxu0 %v16
  %v243 = vpop.f32.mrb[0].mxu0
  %v244 = vadd.f32 %v164, %v243
  %v245 = vpop.f32.mrb[0].mxu0
  %246 = vmatprep.mubr.f32.mxu0 %v21
  %247 = vmatmul.mubr.f32.gmra.mrb[0].mxu0 %v20
  %v248 = vpop.f32.mrb[0].mxu0
  %v249 = vadd.f32 %v169, %v248
  %v250 = vpop.f32.mrb[0].mxu0
  %251 = vmatprep.mubr.f32.mxu0 %v25
  %252 = vmatmul.mubr.f32.gmra.mrb[0].mxu0 %v24
  %v253 = vpop.f32.mrb[0].mxu0
  %v254 = vadd.f32 %v174, %v253
  %v255 = vpop.f32.mrb[0].mxu0
  %256 = vdwg.mxu0
  %v257 = vmax.f32 %v244, 0.0
  %v258 = vmax.f32 %v249, 0.0
  %v259 = vmax.f32 %v254, 0.0
  %vm260 = vcmask 523264
  %261 = vst.msk [vmem:[%s3] sm:$0xff] %vm260, %v257
  %262 = vst.msk [vmem:[%s3 + $0x8] sm:$0xff] %vm260, %v258
  %vm263 = vcmask 517120
  %264 = vst.msk [vmem:[%s3 + $0x10] sm:$0x3] %vm263, %v259
  // Predicated region
  $region14: #{actor_net_forward.5} parent=0 // pred_check
    _
  $region15: #{actor_net_forward.5} parent=0 // pred_check_branch
    %266 = sbr.rel (0) target = $region17
  $region16: #{actor_net_forward.5} parent=0 // pred_region
    _
  $region17: #{actor_net_forward.5} parent=0 // pred_fallthru
    _
  // Predicated region
  $region18: #{actor_net_forward.5} parent=0 // pred_check
    _
  $region19: #{actor_net_forward.5} parent=0 // pred_check_branch
    %268 = sbr.rel (0) target = $region21
  $region20: #{actor_net_forward.5} parent=0 // pred_region
    _
  $region21: #{actor_net_forward.5} parent=0 // pred_fallthru
    _

// kernel: actor_net_forward.6
$region0: #{actor_net_forward.6}
  #allocation0 [shape = 'u32[]', space=smem, size = 0x4, offset = 0x4, fixed_abs, tag = 'smem constant byte address 0x4 - core index']
  #allocation1 [shape = 'u32[144,128]{1,0:T(1,128)}', space=vmem, size = 0x12000, scoped, tag = 'internal scratch']
  %s0 = inlined_call_operand.vmem [shape: f32[2,576], index: 0, kind: input, shape index: {}]
  %s1 = inlined_call_operand.vmem [shape: f32[576,128], index: 1, kind: input, shape index: {}]
  %s2 = inlined_call_operand.vmem [shape: f32[1,128], index: 2, kind: input, shape index: {}]
  %s3 = inlined_call_operand.vmem [shape: f32[2,128], index: 3, kind: output, shape index: {}]
  %s4 = sld [smem:[#allocation0]]
  $region22: #{actor_net_forward.6} parent=0
    _
  %s6 = ssub.s32 1, %s4
  %s7 = scalar_select 0, %s6, %s4
  // Predicated region
  $region2: #{actor_net_forward.6} parent=0 // pred_check
    _
  $region3: #{actor_net_forward.6} parent=0 // pred_check_branch
    %9 = sbr.rel (0) target = $region5
  $region4: #{actor_net_forward.6} parent=0 // pred_region
    _
  $region5: #{actor_net_forward.6} parent=0 // pred_fallthru
    _
  // Predicated region
  $region6: #{actor_net_forward.6} parent=0 // pred_check
    _
  $region7: #{actor_net_forward.6} parent=0 // pred_check_branch
    %11 = sbr.rel (0) target = $region9
  $region8: #{actor_net_forward.6} parent=0 // pred_region
    _
  $region9: #{actor_net_forward.6} parent=0 // pred_fallthru
    _
  // Predicated region
  $region10: #{actor_net_forward.6} parent=0 // pred_check
    _
  $region11: #{actor_net_forward.6} parent=0 // pred_check_branch
    %13 = sbr.rel (0) target = $region13
  $region12: #{actor_net_forward.6} parent=0 // pred_region
    _
  $region13: #{actor_net_forward.6} parent=0 // pred_fallthru
    _
  %v14 = vld [vmem:[%s0] sm:$0xff]
  %v15 = vld [vmem:[%s0 + $0x8] sm:$0x3]
  %v16 = vld [vmem:[%s1] sm:$0xff]
  %v17 = vld [vmem:[%s1 + $0x8] sm:$0xff]
  %v18 = vld [vmem:[%s1 + $0x10] sm:$0xff]
  %v19 = vld [vmem:[%s1 + $0x18] sm:$0xff]
  %v20 = vld [vmem:[%s1 + $0x20] sm:$0xff]
  %v21 = vld [vmem:[%s1 + $0x28] sm:$0xff]
  %v22 = vld [vmem:[%s1 + $0x30] sm:$0xff]
  %v23 = vld [vmem:[%s1 + $0x38] sm:$0xff]
  %v24 = vld [vmem:[%s1 + $0x40] sm:$0xff]
  %v25 = vld [vmem:[%s1 + $0x48] sm:$0xff]
  %v26 = vld [vmem:[%s1 + $0x50] sm:$0xff]
  %v27 = vld [vmem:[%s1 + $0x58] sm:$0xff]
  %v28 = vld [vmem:[%s1 + $0x60] sm:$0xff]
  %v29 = vld [vmem:[%s1 + $0x68] sm:$0xff]
  %v30 = vld [vmem:[%s1 + $0x70] sm:$0xff]
  %v31 = vld [vmem:[%s1 + $0x78] sm:$0xff]
  %v32 = vld [vmem:[%s1 + $0x80] sm:$0xff]
  %v33 = vld [vmem:[%s1 + $0x88] sm:$0xff]
  %v34 = vld [vmem:[%s1 + $0x90] sm:$0xff]
  %v35 = vld [vmem:[%s1 + $0x98] sm:$0xff]
  %v36 = vld [vmem:[%s1 + $0xa0] sm:$0xff]
  %v37 = vld [vmem:[%s1 + $0xa8] sm:$0xff]
  %v38 = vld [vmem:[%s1 + $0xb0] sm:$0xff]
  %v39 = vld [vmem:[%s1 + $0xb8] sm:$0xff]
  %v40 = vld [vmem:[%s1 + $0xc0] sm:$0xff]
  %v41 = vld [vmem:[%s1 + $0xc8] sm:$0xff]
  %v42 = vld [vmem:[%s1 + $0xd0] sm:$0xff]
  %v43 = vld [vmem:[%s1 + $0xd8] sm:$0xff]
  %v44 = vld [vmem:[%s1 + $0xe0] sm:$0xff]
  %v45 = vld [vmem:[%s1 + $0xe8] sm:$0xff]
  %v46 = vld [vmem:[%s1 + $0xf0] sm:$0xff]
  %v47 = vld [vmem:[%s1 + $0xf8] sm:$0xff]
  %v48 = vld [vmem:[%s1 + $0x100] sm:$0xff]
  %v49 = vld [vmem:[%s1 + $0x108] sm:$0xff]
  %v50 = vld [vmem:[%s1 + $0x110] sm:$0xff]
  %v51 = vld [vmem:[%s1 + $0x118] sm:$0xff]
  %v52 = vld [vmem:[%s1 + $0x120] sm:$0xff]
  %v53 = vld [vmem:[%s1 + $0x128] sm:$0xff]
  %v54 = vld [vmem:[%s1 + $0x130] sm:$0xff]
  %v55 = vld [vmem:[%s1 + $0x138] sm:$0xff]
  %v56 = vld [vmem:[%s1 + $0x140] sm:$0xff]
  %v57 = vld [vmem:[%s1 + $0x148] sm:$0xff]
  %v58 = vld [vmem:[%s1 + $0x150] sm:$0xff]
  %v59 = vld [vmem:[%s1 + $0x158] sm:$0xff]
  %v60 = vld [vmem:[%s1 + $0x160] sm:$0xff]
  %v61 = vld [vmem:[%s1 + $0x168] sm:$0xff]
  %v62 = vld [vmem:[%s1 + $0x170] sm:$0xff]
  %v63 = vld [vmem:[%s1 + $0x178] sm:$0xff]
  %v64 = vld [vmem:[%s1 + $0x180] sm:$0xff]
  %v65 = vld [vmem:[%s1 + $0x188] sm:$0xff]
  %v66 = vld [vmem:[%s1 + $0x190] sm:$0xff]
  %v67 = vld [vmem:[%s1 + $0x198] sm:$0xff]
  %v68 = vld [vmem:[%s1 + $0x1a0] sm:$0xff]
  %v69 = vld [vmem:[%s1 + $0x1a8] sm:$0xff]
  %v70 = vld [vmem:[%s1 + $0x1b0] sm:$0xff]
  %v71 = vld [vmem:[%s1 + $0x1b8] sm:$0xff]
  %v72 = vld [vmem:[%s1 + $0x1c0] sm:$0xff]
  %v73 = vld [vmem:[%s1 + $0x1c8] sm:$0xff]
  %v74 = vld [vmem:[%s1 + $0x1d0] sm:$0xff]
  %v75 = vld [vmem:[%s1 + $0x1d8] sm:$0xff]
  %v76 = vld [vmem:[%s1 + $0x1e0] sm:$0xff]
  %v77 = vld [vmem:[%s1 + $0x1e8] sm:$0xff]
  %v78 = vld [vmem:[%s1 + $0x1f0] sm:$0xff]
  %v79 = vld [vmem:[%s1 + $0x1f8] sm:$0xff]
  %v80 = vld [vmem:[%s1 + $0x200] sm:$0xff]
  %v81 = vld [vmem:[%s1 + $0x208] sm:$0xff]
  %v82 = vld [vmem:[%s1 + $0x210] sm:$0xff]
  %v83 = vld [vmem:[%s1 + $0x218] sm:$0xff]
  %v84 = vld [vmem:[%s1 + $0x220] sm:$0xff]
  %v85 = vld [vmem:[%s1 + $0x228] sm:$0xff]
  %v86 = vld [vmem:[%s1 + $0x230] sm:$0xff]
  %v87 = vld [vmem:[%s1 + $0x238] sm:$0xff]
  %v88 = vld [vmem:[%s2] sm:$0x1]
  %v90 = vlaneseq
  %v91 = vshrl.u32 %v90, 7
  %v92 = vsub.s32 0, %v91
  %v93 = vrot.slane %v88, %v92
  %v97 = vcombine.high %v14, %v14
  %v99 = vunpack.c.l.s4 1983009808
  %v100 = vunpack.c.0.s8 %v99
  %v101 = vlaneseq
  %v102 = vshrl.u32 %v101, 7
  %v103 = vsub.s32 %v100, %v102
  %v104 = vrot.slane %v14, %v103
  %v106 = vunpack.c.l.s4 1983009808
  %v107 = vunpack.c.0.s8 %v106
  %v108 = vlaneseq
  %v109 = vshrl.u32 %v108, 7
  %v110 = vsub.s32 %v107, %v109
  %v111 = vrot.slane %v97, %v110
  %v112 = vcombine.high %v104, %v104
  %v113 = vcombine.high %v111, %v111
  %v115 = vunpack.c.l.s4 1983009808
  %v116 = vunpack.c.0.s8 %v115
  %v117 = vlaneseq
  %v118 = vshrl.u32 %v117, 7
  %v119 = vsub.s32 %v116, %v118
  %v120 = vrot.slane %v15, %v119
  %vm125 = vcmask 523264
  %v126 = vsel %vm125, %v120, 0
  %128 = vmatprep.subr.mxu0 0.0
  %129 = vmatpush1.msra.mxu0 %v16
  %130 = vmatprep.subr.mxu0 0.0
  %131 = vmatpush1.msra.mxu0 %v17
  %132 = vmatprep.subr.mxu0 0.0
  %133 = vmatpush1.msra.mxu0 %v18
  %134 = vmatprep.subr.mxu0 0.0
  %135 = vmatpush1.msra.mxu0 %v19
  %136 = vmatprep.subr.mxu0 0.0
  %137 = vmatpush1.msra.mxu0 %v20
  %138 = vmatprep.subr.mxu0 0.0
  %139 = vmatpush1.msra.mxu0 %v21
  %140 = vmatprep.subr.mxu0 0.0
  %141 = vmatpush1.msra.mxu0 %v22
  %142 = vmatprep.subr.mxu0 0.0
  %143 = vmatpush1.msra.mxu0 %v23
  %144 = vmatprep.subr.mxu0 0.0
  %145 = vmatpush1.msra.mxu0 %v24
  %146 = vmatprep.subr.mxu0 0.0
  %147 = vmatpush1.msra.mxu0 %v25
  %148 = vmatprep.subr.mxu0 0.0
  %149 = vmatpush1.msra.mxu0 %v26
  %150 = vmatprep.subr.mxu0 0.0
  %151 = vmatpush1.msra.mxu0 %v27
  %152 = vmatprep.subr.mxu0 0.0
  %153 = vmatpush1.msra.mxu0 %v28
  %154 = vmatprep.subr.mxu0 0.0
  %155 = vmatpush1.msra.mxu0 %v29
  %156 = vmatprep.subr.mxu0 0.0
  %157 = vmatpush1.msra.mxu0 %v30
  %158 = vmatprep.subr.mxu0 0.0
  %159 = vmatpush1.msra.mxu0 %v31
  %160 = vmatprep.subr.mxu0 0.0
  %161 = vmatpush1.msra.mxu0 %v32
  %162 = vmatprep.subr.mxu0 0.0
  %163 = vmatpush1.msra.mxu0 %v33
  %164 = vmatprep.subr.mxu0 0.0
  %165 = vmatpush1.msra.mxu0 %v34
  %166 = vmatprep.subr.mxu0 0.0
  %167 = vmatpush1.msra.mxu0 %v35
  %168 = vmatprep.subr.mxu0 0.0
  %169 = vmatpush1.msra.mxu0 %v36
  %170 = vmatprep.subr.mxu0 0.0
  %171 = vmatpush1.msra.mxu0 %v37
  %172 = vmatprep.subr.mxu0 0.0
  %173 = vmatpush1.msra.mxu0 %v38
  %174 = vmatprep.subr.mxu0 0.0
  %175 = vmatpush1.msra.mxu0 %v39
  %176 = vmatprep.subr.mxu0 0.0
  %177 = vmatpush1.msra.mxu0 %v40
  %178 = vmatprep.subr.mxu0 0.0
  %179 = vmatpush1.msra.mxu0 %v41
  %180 = vmatprep.subr.mxu0 0.0
  %181 = vmatpush1.msra.mxu0 %v42
  %182 = vmatprep.subr.mxu0 0.0
  %183 = vmatpush1.msra.mxu0 %v43
  %184 = vmatprep.subr.mxu0 0.0
  %185 = vmatpush1.msra.mxu0 %v44
  %186 = vmatprep.subr.mxu0 0.0
  %187 = vmatpush1.msra.mxu0 %v45
  %188 = vmatprep.subr.mxu0 0.0
  %189 = vmatpush1.msra.mxu0 %v46
  %190 = vmatprep.subr.mxu0 0.0
  %191 = vmatpush1.msra.mxu0 %v47
  %192 = vmatprep.mubr.f32.mxu0 %v112
  %193 = vmatmul.mubr.f32.gmra.mrb[0].mxu0 %v104
  %v194 = vpop.f32.mrb[0].mxu0
  %v195 = vadd.f32 %v93, %v194
  %v196 = vpop.f32.mrb[0].mxu0
  %197 = vdwg.mxu0
  %198 = vmatprep.subr.mxu0 0.0
  %199 = vmatpush1.msra.mxu0 %v48
  %200 = vmatprep.subr.mxu0 0.0
  %201 = vmatpush1.msra.mxu0 %v49
  %202 = vmatprep.subr.mxu0 0.0
  %203 = vmatpush1.msra.mxu0 %v50
  %204 = vmatprep.subr.mxu0 0.0
  %205 = vmatpush1.msra.mxu0 %v51
  %206 = vmatprep.subr.mxu0 0.0
  %207 = vmatpush1.msra.mxu0 %v52
  %208 = vmatprep.subr.mxu0 0.0
  %209 = vmatpush1.msra.mxu0 %v53
  %210 = vmatprep.subr.mxu0 0.0
  %211 = vmatpush1.msra.mxu0 %v54
  %212 = vmatprep.subr.mxu0 0.0
  %213 = vmatpush1.msra.mxu0 %v55
  %214 = vmatprep.subr.mxu0 0.0
  %215 = vmatpush1.msra.mxu0 %v56
  %216 = vmatprep.subr.mxu0 0.0
  %217 = vmatpush1.msra.mxu0 %v57
  %218 = vmatprep.subr.mxu0 0.0
  %219 = vmatpush1.msra.mxu0 %v58
  %220 = vmatprep.subr.mxu0 0.0
  %221 = vmatpush1.msra.mxu0 %v59
  %222 = vmatprep.subr.mxu0 0.0
  %223 = vmatpush1.msra.mxu0 %v60
  %224 = vmatprep.subr.mxu0 0.0
  %225 = vmatpush1.msra.mxu0 %v61
  %226 = vmatprep.subr.mxu0 0.0
  %227 = vmatpush1.msra.mxu0 %v62
  %228 = vmatprep.subr.mxu0 0.0
  %229 = vmatpush1.msra.mxu0 %v63
  %230 = vmatprep.subr.mxu0 0.0
  %231 = vmatpush1.msra.mxu0 %v64
  %232 = vmatprep.subr.mxu0 0.0
  %233 = vmatpush1.msra.mxu0 %v65
  %234 = vmatprep.subr.mxu0 0.0
  %235 = vmatpush1.msra.mxu0 %v66
  %236 = vmatprep.subr.mxu0 0.0
  %237 = vmatpush1.msra.mxu0 %v67
  %238 = vmatprep.subr.mxu0 0.0
  %239 = vmatpush1.msra.mxu0 %v68
  %240 = vmatprep.subr.mxu0 0.0
  %241 = vmatpush1.msra.mxu0 %v69
  %242 = vmatprep.subr.mxu0 0.0
  %243 = vmatpush1.msra.mxu0 %v70
  %244 = vmatprep.subr.mxu0 0.0
  %245 = vmatpush1.msra.mxu0 %v71
  %246 = vmatprep.subr.mxu0 0.0
  %247 = vmatpush1.msra.mxu0 %v72
  %248 = vmatprep.subr.mxu0 0.0
  %249 = vmatpush1.msra.mxu0 %v73
  %250 = vmatprep.subr.mxu0 0.0
  %251 = vmatpush1.msra.mxu0 %v74
  %252 = vmatprep.subr.mxu0 0.0
  %253 = vmatpush1.msra.mxu0 %v75
  %254 = vmatprep.subr.mxu0 0.0
  %255 = vmatpush1.msra.mxu0 %v76
  %256 = vmatprep.subr.mxu0 0.0
  %257 = vmatpush1.msra.mxu0 %v77
  %258 = vmatprep.subr.mxu0 0.0
  %259 = vmatpush1.msra.mxu0 %v78
  %260 = vmatprep.subr.mxu0 0.0
  %261 = vmatpush1.msra.mxu0 %v79
  %262 = vmatprep.mubr.f32.mxu0 %v113
  %263 = vmatmul.mubr.f32.gmra.mrb[0].mxu0 %v111
  %v264 = vpop.f32.mrb[0].mxu0
  %v265 = vadd.f32 %v195, %v264
  %v266 = vpop.f32.mrb[0].mxu0
  %267 = vdwg.mxu0
  %268 = vmatprep.subr.mxu0 0.0
  %269 = vmatpush1.msra.mxu0 %v80
  %270 = vmatprep.subr.mxu0 0.0
  %271 = vmatpush1.msra.mxu0 %v81
  %272 = vmatprep.subr.mxu0 0.0
  %273 = vmatpush1.msra.mxu0 %v82
  %274 = vmatprep.subr.mxu0 0.0
  %275 = vmatpush1.msra.mxu0 %v83
  %276 = vmatprep.subr.mxu0 0.0
  %277 = vmatpush1.msra.mxu0 %v84
  %278 = vmatprep.subr.mxu0 0.0
  %279 = vmatpush1.msra.mxu0 %v85
  %280 = vmatprep.subr.mxu0 0.0
  %281 = vmatpush1.msra.mxu0 %v86
  %282 = vmatprep.subr.mxu0 0.0
  %283 = vmatpush1.msra.mxu0 %v87
  %284 = vmatprep.subr.mxu0 0.0
  %285 = vmatpush1.msra.mxu0 0.0
  %286 = vmatprep.subr.mxu0 0.0
  %287 = vmatpush1.msra.mxu0 0.0
  %288 = vmatprep.subr.mxu0 0.0
  %289 = vmatpush1.msra.mxu0 0.0
  %290 = vmatprep.subr.mxu0 0.0
  %291 = vmatpush1.msra.mxu0 0.0
  %292 = vmatprep.subr.mxu0 0.0
  %293 = vmatpush1.msra.mxu0 0.0
  %294 = vmatprep.subr.mxu0 0.0
  %295 = vmatpush1.msra.mxu0 0.0
  %296 = vmatprep.subr.mxu0 0.0
  %297 = vmatpush1.msra.mxu0 0.0
  %298 = vmatprep.subr.mxu0 0.0
  %299 = vmatpush1.msra.mxu0 0.0
  %300 = vmatprep.subr.mxu0 0.0
  %301 = vmatpush1.msra.mxu0 0.0
  %302 = vmatprep.subr.mxu0 0.0
  %303 = vmatpush1.msra.mxu0 0.0
  %304 = vmatprep.subr.mxu0 0.0
  %305 = vmatpush1.msra.mxu0 0.0
  %306 = vmatprep.subr.mxu0 0.0
  %307 = vmatpush1.msra.mxu0 0.0
  %308 = vmatprep.subr.mxu0 0.0
  %309 = vmatpush1.msra.mxu0 0.0
  %310 = vmatprep.subr.mxu0 0.0
  %311 = vmatpush1.msra.mxu0 0.0
  %312 = vmatprep.subr.mxu0 0.0
  %313 = vmatpush1.msra.mxu0 0.0
  %314 = vmatprep.subr.mxu0 0.0
  %315 = vmatpush1.msra.mxu0 0.0
  %316 = vmatprep.subr.mxu0 0.0
  %317 = vmatpush1.msra.mxu0 0.0
  %318 = vmatprep.subr.mxu0 0.0
  %319 = vmatpush1.msra.mxu0 0.0
  %320 = vmatprep.subr.mxu0 0.0
  %321 = vmatpush1.msra.mxu0 0.0
  %322 = vmatprep.subr.mxu0 0.0
  %323 = vmatpush1.msra.mxu0 0.0
  %324 = vmatprep.subr.mxu0 0.0
  %325 = vmatpush1.msra.mxu0 0.0
  %326 = vmatprep.subr.mxu0 0.0
  %327 = vmatpush1.msra.mxu0 0.0
  %328 = vmatprep.subr.mxu0 0.0
  %329 = vmatpush1.msra.mxu0 0.0
  %330 = vmatprep.subr.mxu0 0.0
  %331 = vmatpush1.msra.mxu0 0.0
  %332 = vmatprep.mubr.f32.mxu0 0.0
  %333 = vmatmul.mubr.f32.gmra.mrb[0].mxu0 %v126
  %v334 = vpop.f32.mrb[0].mxu0
  %v335 = vadd.f32 %v265, %v334
  %v336 = vpop.f32.mrb[0].mxu0
  %337 = vdwg.mxu0
  %v338 = vmax.f32 %v335, 0.0
  %339 = vst [vmem:[%s3] sm:$0x3] %v338
  // Predicated region
  $region14: #{actor_net_forward.6} parent=0 // pred_check
    _
  $region15: #{actor_net_forward.6} parent=0 // pred_check_branch
    %341 = sbr.rel (0) target = $region17
  $region16: #{actor_net_forward.6} parent=0 // pred_region
    _
  $region17: #{actor_net_forward.6} parent=0 // pred_fallthru
    _
  // Predicated region
  $region18: #{actor_net_forward.6} parent=0 // pred_check
    _
  $region19: #{actor_net_forward.6} parent=0 // pred_check_branch
    %343 = sbr.rel (0) target = $region21
  $region20: #{actor_net_forward.6} parent=0 // pred_region
    _
  $region21: #{actor_net_forward.6} parent=0 // pred_fallthru
    _

// kernel: actor_net_forward.7
$region0: #{actor_net_forward.7}
  #allocation0 [shape = 'u32[]', space=smem, size = 0x4, offset = 0x4, fixed_abs, tag = 'smem constant byte address 0x4 - core index']
  #allocation1 [shape = 'u32[144,128]{1,0:T(1,128)}', space=vmem, size = 0x12000, scoped, tag = 'internal scratch']
  %s0 = inlined_call_operand.vmem [shape: f32[2,128], index: 0, kind: input, shape index: {}]
  %s1 = inlined_call_operand.vmem [shape: f32[128,512], index: 1, kind: input, shape index: {}]
  %s2 = inlined_call_operand.vmem [shape: f32[1,512], index: 2, kind: input, shape index: {}]
  %s3 = inlined_call_operand.vmem [shape: f32[512,768], index: 3, kind: input, shape index: {}]
  %s4 = inlined_call_operand.vmem [shape: f32[1,768], index: 4, kind: input, shape index: {}]
  %s5 = inlined_call_operand.vmem [shape: f32[768,128], index: 5, kind: input, shape index: {}]
  %s6 = inlined_call_operand.vmem [shape: f32[1,128], index: 6, kind: input, shape index: {}]
  %s7 = inlined_call_operand.vmem [shape: f32[2,128], index: 7, kind: output, shape index: {}]
  %s8 = sld [smem:[#allocation0]]
  $region38: #{actor_net_forward.7} parent=0
    _
  %s10 = ssub.s32 1, %s8
  %s11 = scalar_select 0, %s10, %s8
  // Predicated region
  $region2: #{actor_net_forward.7} parent=0 // pred_check
    _
  $region3: #{actor_net_forward.7} parent=0 // pred_check_branch
    %13 = sbr.rel (0) target = $region5
  $region4: #{actor_net_forward.7} parent=0 // pred_region
    _
  $region5: #{actor_net_forward.7} parent=0 // pred_fallthru
    _
  // Predicated region
  $region6: #{actor_net_forward.7} parent=0 // pred_check
    _
  $region7: #{actor_net_forward.7} parent=0 // pred_check_branch
    %15 = sbr.rel (0) target = $region9
  $region8: #{actor_net_forward.7} parent=0 // pred_region
    _
  $region9: #{actor_net_forward.7} parent=0 // pred_fallthru
    _
  // Predicated region
  $region10: #{actor_net_forward.7} parent=0 // pred_check
    _
  $region11: #{actor_net_forward.7} parent=0 // pred_check_branch
    %17 = sbr.rel (0) target = $region13
  $region12: #{actor_net_forward.7} parent=0 // pred_region
    _
  $region13: #{actor_net_forward.7} parent=0 // pred_fallthru
    _
  // Predicated region
  $region14: #{actor_net_forward.7} parent=0 // pred_check
    _
  $region15: #{actor_net_forward.7} parent=0 // pred_check_branch
    %19 = sbr.rel (0) target = $region17
  $region16: #{actor_net_forward.7} parent=0 // pred_region
    _
  $region17: #{actor_net_forward.7} parent=0 // pred_fallthru
    _
  // Predicated region
  $region18: #{actor_net_forward.7} parent=0 // pred_check
    _
  $region19: #{actor_net_forward.7} parent=0 // pred_check_branch
    %21 = sbr.rel (0) target = $region21
  $region20: #{actor_net_forward.7} parent=0 // pred_region
    _
  $region21: #{actor_net_forward.7} parent=0 // pred_fallthru
    _
  // Predicated region
  $region22: #{actor_net_forward.7} parent=0 // pred_check
    _
  $region23: #{actor_net_forward.7} parent=0 // pred_check_branch
    %23 = sbr.rel (0) target = $region25
  $region24: #{actor_net_forward.7} parent=0 // pred_region
    _
  $region25: #{actor_net_forward.7} parent=0 // pred_fallthru
    _
  // Predicated region
  $region26: #{actor_net_forward.7} parent=0 // pred_check
    _
  $region27: #{actor_net_forward.7} parent=0 // pred_check_branch
    %25 = sbr.rel (0) target = $region29
  $region28: #{actor_net_forward.7} parent=0 // pred_region
    _
  $region29: #{actor_net_forward.7} parent=0 // pred_fallthru
    _
  %v26 = vld [vmem:[%s0] sm:$0x3]
  %v27 = vld [vmem:[%s1] sm:$0xff]
  %v28 = vld [vmem:[%s1 + $0x8] sm:$0xff]
  %v29 = vld [vmem:[%s1 + $0x10] sm:$0xff]
  %v30 = vld [vmem:[%s1 + $0x18] sm:$0xff]
  %v31 = vld [vmem:[%s1 + $0x20] sm:$0xff]
  %v32 = vld [vmem:[%s1 + $0x28] sm:$0xff]
  %v33 = vld [vmem:[%s1 + $0x30] sm:$0xff]
  %v34 = vld [vmem:[%s1 + $0x38] sm:$0xff]
  %v35 = vld [vmem:[%s1 + $0x40] sm:$0xff]
  %v36 = vld [vmem:[%s1 + $0x48] sm:$0xff]
  %v37 = vld [vmem:[%s1 + $0x50] sm:$0xff]
  %v38 = vld [vmem:[%s1 + $0x58] sm:$0xff]
  %v39 = vld [vmem:[%s1 + $0x60] sm:$0xff]
  %v40 = vld [vmem:[%s1 + $0x68] sm:$0xff]
  %v41 = vld [vmem:[%s1 + $0x70] sm:$0xff]
  %v42 = vld [vmem:[%s1 + $0x78] sm:$0xff]
  %v43 = vld [vmem:[%s1 + $0x80] sm:$0xff]
  %v44 = vld [vmem:[%s1 + $0x88] sm:$0xff]
  %v45 = vld [vmem:[%s1 + $0x90] sm:$0xff]
  %v46 = vld [vmem:[%s1 + $0x98] sm:$0xff]
  %v47 = vld [vmem:[%s1 + $0xa0] sm:$0xff]
  %v48 = vld [vmem:[%s1 + $0xa8] sm:$0xff]
  %v49 = vld [vmem:[%s1 + $0xb0] sm:$0xff]
  %v50 = vld [vmem:[%s1 + $0xb8] sm:$0xff]
  %v51 = vld [vmem:[%s1 + $0xc0] sm:$0xff]
  %v52 = vld [vmem:[%s1 + $0xc8] sm:$0xff]
  %v53 = vld [vmem:[%s1 + $0xd0] sm:$0xff]
  %v54 = vld [vmem:[%s1 + $0xd8] sm:$0xff]
  %v55 = vld [vmem:[%s1 + $0xe0] sm:$0xff]
  %v56 = vld [vmem:[%s1 + $0xe8] sm:$0xff]
  %v57 = vld [vmem:[%s1 + $0xf0] sm:$0xff]
  %v58 = vld [vmem:[%s1 + $0xf8] sm:$0xff]
  %v59 = vld [vmem:[%s1 + $0x100] sm:$0xff]
  %v60 = vld [vmem:[%s1 + $0x108] sm:$0xff]
  %v61 = vld [vmem:[%s1 + $0x110] sm:$0xff]
  %v62 = vld [vmem:[%s1 + $0x118] sm:$0xff]
  %v63 = vld [vmem:[%s1 + $0x120] sm:$0xff]
  %v64 = vld [vmem:[%s1 + $0x128] sm:$0xff]
  %v65 = vld [vmem:[%s1 + $0x130] sm:$0xff]
  %v66 = vld [vmem:[%s1 + $0x138] sm:$0xff]
  %v67 = vld [vmem:[%s1 + $0x140] sm:$0xff]
  %v68 = vld [vmem:[%s1 + $0x148] sm:$0xff]
  %v69 = vld [vmem:[%s1 + $0x150] sm:$0xff]
  %v70 = vld [vmem:[%s1 + $0x158] sm:$0xff]
  %v71 = vld [vmem:[%s1 + $0x160] sm:$0xff]
  %v72 = vld [vmem:[%s1 + $0x168] sm:$0xff]
  %v73 = vld [vmem:[%s1 + $0x170] sm:$0xff]
  %v74 = vld [vmem:[%s1 + $0x178] sm:$0xff]
  %v75 = vld [vmem:[%s1 + $0x180] sm:$0xff]
  %v76 = vld [vmem:[%s1 + $0x188] sm:$0xff]
  %v77 = vld [vmem:[%s1 + $0x190] sm:$0xff]
  %v78 = vld [vmem:[%s1 + $0x198] sm:$0xff]
  %v79 = vld [vmem:[%s1 + $0x1a0] sm:$0xff]
  %v80 = vld [vmem:[%s1 + $0x1a8] sm:$0xff]
  %v81 = vld [vmem:[%s1 + $0x1b0] sm:$0xff]
  %v82 = vld [vmem:[%s1 + $0x1b8] sm:$0xff]
  %v83 = vld [vmem:[%s1 + $0x1c0] sm:$0xff]
  %v84 = vld [vmem:[%s1 + $0x1c8] sm:$0xff]
  %v85 = vld [vmem:[%s1 + $0x1d0] sm:$0xff]
  %v86 = vld [vmem:[%s1 + $0x1d8] sm:$0xff]
  %v87 = vld [vmem:[%s1 + $0x1e0] sm:$0xff]
  %v88 = vld [vmem:[%s1 + $0x1e8] sm:$0xff]
  %v89 = vld [vmem:[%s1 + $0x1f0] sm:$0xff]
  %v90 = vld [vmem:[%s1 + $0x1f8] sm:$0xff]
  %v91 = vld [vmem:[%s2] sm:$0xf]
  %v93 = vlaneseq
  %v94 = vshrl.u32 %v93, 7
  %v95 = vsub.s32 0, %v94
  %v96 = vrot.slane %v91, %v95
  %v97 = vlaneseq
  %v98 = vshrl.u32 %v97, 7
  %v99 = vsub.s32 1, %v98
  %v100 = vrot.slane %v91, %v99
  %v101 = vlaneseq
  %v102 = vshrl.u32 %v101, 7
  %v103 = vsub.s32 2, %v102
  %v104 = vrot.slane %v91, %v103
  %v105 = vlaneseq
  %v106 = vshrl.u32 %v105, 7
  %v107 = vsub.s32 3, %v106
  %v108 = vrot.slane %v91, %v107
  %113 = vmatprep.subr.mxu0 %v28
  %114 = vmatpush1.msra.mxu0 %v27
  %115 = vmatprep.subr.mxu0 %v32
  %116 = vmatpush1.msra.mxu0 %v31
  %117 = vmatprep.subr.mxu0 %v36
  %118 = vmatpush1.msra.mxu0 %v35
  %119 = vmatprep.subr.mxu0 %v40
  %120 = vmatpush1.msra.mxu0 %v39
  %121 = vmatprep.subr.mxu0 %v44
  %122 = vmatpush1.msra.mxu0 %v43
  %123 = vmatprep.subr.mxu0 %v48
  %124 = vmatpush1.msra.mxu0 %v47
  %125 = vmatprep.subr.mxu0 %v52
  %126 = vmatpush1.msra.mxu0 %v51
  %127 = vmatprep.subr.mxu0 %v56
  %128 = vmatpush1.msra.mxu0 %v55
  %129 = vmatprep.subr.mxu0 %v60
  %130 = vmatpush1.msra.mxu0 %v59
  %131 = vmatprep.subr.mxu0 %v64
  %132 = vmatpush1.msra.mxu0 %v63
  %133 = vmatprep.subr.mxu0 %v68
  %134 = vmatpush1.msra.mxu0 %v67
  %135 = vmatprep.subr.mxu0 %v72
  %136 = vmatpush1.msra.mxu0 %v71
  %137 = vmatprep.subr.mxu0 %v76
  %138 = vmatpush1.msra.mxu0 %v75
  %139 = vmatprep.subr.mxu0 %v80
  %140 = vmatpush1.msra.mxu0 %v79
  %141 = vmatprep.subr.mxu0 %v84
  %142 = vmatpush1.msra.mxu0 %v83
  %143 = vmatprep.subr.mxu0 %v88
  %144 = vmatpush1.msra.mxu0 %v87
  %145 = vmatprep.subr.mxu0 0.0
  %146 = vmatpush1.msra.mxu0 0.0
  %147 = vmatprep.subr.mxu0 0.0
  %148 = vmatpush1.msra.mxu0 0.0
  %149 = vmatprep.subr.mxu0 0.0
  %150 = vmatpush1.msra.mxu0 0.0
  %151 = vmatprep.subr.mxu0 0.0
  %152 = vmatpush1.msra.mxu0 0.0
  %153 = vmatprep.subr.mxu0 0.0
  %154 = vmatpush1.msra.mxu0 0.0
  %155 = vmatprep.subr.mxu0 0.0
  %156 = vmatpush1.msra.mxu0 0.0
  %157 = vmatprep.subr.mxu0 0.0
  %158 = vmatpush1.msra.mxu0 0.0
  %159 = vmatprep.subr.mxu0 0.0
  %160 = vmatpush1.msra.mxu0 0.0
  %161 = vmatprep.subr.mxu0 0.0
  %162 = vmatpush1.msra.mxu0 0.0
  %163 = vmatprep.subr.mxu0 0.0
  %164 = vmatpush1.msra.mxu0 0.0
  %165 = vmatprep.subr.mxu0 0.0
  %166 = vmatpush1.msra.mxu0 0.0
  %167 = vmatprep.subr.mxu0 0.0
  %168 = vmatpush1.msra.mxu0 0.0
  %169 = vmatprep.subr.mxu0 0.0
  %170 = vmatpush1.msra.mxu0 0.0
  %171 = vmatprep.subr.mxu0 0.0
  %172 = vmatpush1.msra.mxu0 0.0
  %173 = vmatprep.subr.mxu0 0.0
  %174 = vmatpush1.msra.mxu0 0.0
  %175 = vmatprep.subr.mxu0 0.0
  %176 = vmatpush1.msra.mxu0 0.0
  %177 = vmatprep.mubr.f32.mxu0 0.0
  %178 = vmatmul.mubr.f32.gmra.mrb[0].mxu0 %v26
  %v179 = vpop.f32.mrb[0].mxu0
  %v180 = vadd.f32 %v96, %v179
  %v181 = vpop.f32.mrb[0].mxu0
  %v182 = vadd.f32 %v100, %v181
  %183 = vdwg.mxu0
  %184 = vmatprep.subr.mxu0 %v30
  %185 = vmatpush1.msra.mxu0 %v29
  %186 = vmatprep.subr.mxu0 %v34
  %187 = vmatpush1.msra.mxu0 %v33
  %188 = vmatprep.subr.mxu0 %v38
  %189 = vmatpush1.msra.mxu0 %v37
  %190 = vmatprep.subr.mxu0 %v42
  %191 = vmatpush1.msra.mxu0 %v41
  %192 = vmatprep.subr.mxu0 %v46
  %193 = vmatpush1.msra.mxu0 %v45
  %194 = vmatprep.subr.mxu0 %v50
  %195 = vmatpush1.msra.mxu0 %v49
  %196 = vmatprep.subr.mxu0 %v54
  %197 = vmatpush1.msra.mxu0 %v53
  %198 = vmatprep.subr.mxu0 %v58
  %199 = vmatpush1.msra.mxu0 %v57
  %200 = vmatprep.subr.mxu0 %v62
  %201 = vmatpush1.msra.mxu0 %v61
  %202 = vmatprep.subr.mxu0 %v66
  %203 = vmatpush1.msra.mxu0 %v65
  %204 = vmatprep.subr.mxu0 %v70
  %205 = vmatpush1.msra.mxu0 %v69
  %206 = vmatprep.subr.mxu0 %v74
  %207 = vmatpush1.msra.mxu0 %v73
  %208 = vmatprep.subr.mxu0 %v78
  %209 = vmatpush1.msra.mxu0 %v77
  %210 = vmatprep.subr.mxu0 %v82
  %211 = vmatpush1.msra.mxu0 %v81
  %212 = vmatprep.subr.mxu0 %v86
  %213 = vmatpush1.msra.mxu0 %v85
  %214 = vmatprep.subr.mxu0 %v90
  %215 = vmatpush1.msra.mxu0 %v89
  %216 = vmatprep.subr.mxu0 0.0
  %217 = vmatpush1.msra.mxu0 0.0
  %218 = vmatprep.subr.mxu0 0.0
  %219 = vmatpush1.msra.mxu0 0.0
  %220 = vmatprep.subr.mxu0 0.0
  %221 = vmatpush1.msra.mxu0 0.0
  %222 = vmatprep.subr.mxu0 0.0
  %223 = vmatpush1.msra.mxu0 0.0
  %224 = vmatprep.subr.mxu0 0.0
  %225 = vmatpush1.msra.mxu0 0.0
  %226 = vmatprep.subr.mxu0 0.0
  %227 = vmatpush1.msra.mxu0 0.0
  %228 = vmatprep.subr.mxu0 0.0
  %229 = vmatpush1.msra.mxu0 0.0
  %230 = vmatprep.subr.mxu0 0.0
  %231 = vmatpush1.msra.mxu0 0.0
  %232 = vmatprep.subr.mxu0 0.0
  %233 = vmatpush1.msra.mxu0 0.0
  %234 = vmatprep.subr.mxu0 0.0
  %235 = vmatpush1.msra.mxu0 0.0
  %236 = vmatprep.subr.mxu0 0.0
  %237 = vmatpush1.msra.mxu0 0.0
  %238 = vmatprep.subr.mxu0 0.0
  %239 = vmatpush1.msra.mxu0 0.0
  %240 = vmatprep.subr.mxu0 0.0
  %241 = vmatpush1.msra.mxu0 0.0
  %242 = vmatprep.subr.mxu0 0.0
  %243 = vmatpush1.msra.mxu0 0.0
  %244 = vmatprep.subr.mxu0 0.0
  %245 = vmatpush1.msra.mxu0 0.0
  %246 = vmatprep.subr.mxu0 0.0
  %247 = vmatpush1.msra.mxu0 0.0
  %248 = vmatprep.mubr.f32.mxu0 0.0
  %249 = vmatmul.mubr.f32.gmra.mrb[0].mxu0 %v26
  %v250 = vpop.f32.mrb[0].mxu0
  %v251 = vadd.f32 %v104, %v250
  %v252 = vpop.f32.mrb[0].mxu0
  %v253 = vadd.f32 %v108, %v252
  %254 = vdwg.mxu0
  %v255 = vmax.f32 %v180, 0.0
  %v256 = vmax.f32 %v182, 0.0
  %v257 = vmax.f32 %v251, 0.0
  %v258 = vmax.f32 %v253, 0.0
  %v259 = vld [vmem:[%s3] sm:$0xff]
  %v260 = vld [vmem:[%s3 + $0x8] sm:$0xff]
  %v261 = vld [vmem:[%s3 + $0x10] sm:$0xff]
  %v262 = vld [vmem:[%s3 + $0x18] sm:$0xff]
  %v263 = vld [vmem:[%s3 + $0x20] sm:$0xff]
  %v264 = vld [vmem:[%s3 + $0x28] sm:$0xff]
  %v265 = vld [vmem:[%s3 + $0x30] sm:$0xff]
  %v266 = vld [vmem:[%s3 + $0x38] sm:$0xff]
  %v267 = vld [vmem:[%s3 + $0x40] sm:$0xff]
  %v268 = vld [vmem:[%s3 + $0x48] sm:$0xff]
  %v269 = vld [vmem:[%s3 + $0x50] sm:$0xff]
  %v270 = vld [vmem:[%s3 + $0x58] sm:$0xff]
  %v271 = vld [vmem:[%s3 + $0x60] sm:$0xff]
  %v272 = vld [vmem:[%s3 + $0x68] sm:$0xff]
  %v273 = vld [vmem:[%s3 + $0x70] sm:$0xff]
  %v274 = vld [vmem:[%s3 + $0x78] sm:$0xff]
  %v275 = vld [vmem:[%s3 + $0x80] sm:$0xff]
  %v276 = vld [vmem:[%s3 + $0x88] sm:$0xff]
  %v277 = vld [vmem:[%s3 + $0x90] sm:$0xff]
  %v278 = vld [vmem:[%s3 + $0x98] sm:$0xff]
  %v279 = vld [vmem:[%s3 + $0xa0] sm:$0xff]
  %v280 = vld [vmem:[%s3 + $0xa8] sm:$0xff]
  %v281 = vld [vmem:[%s3 + $0xb0] sm:$0xff]
  %v282 = vld [vmem:[%s3 + $0xb8] sm:$0xff]
  %v283 = vld [vmem:[%s3 + $0xc0] sm:$0xff]
  %v284 = vld [vmem:[%s3 + $0xc8] sm:$0xff]
  %v285 = vld [vmem:[%s3 + $0xd0] sm:$0xff]
  %v286 = vld [vmem:[%s3 + $0xd8] sm:$0xff]
  %v287 = vld [vmem:[%s3 + $0xe0] sm:$0xff]
  %v288 = vld [vmem:[%s3 + $0xe8] sm:$0xff]
  %v289 = vld [vmem:[%s3 + $0xf0] sm:$0xff]
  %v290 = vld [vmem:[%s3 + $0xf8] sm:$0xff]
  %v291 = vld [vmem:[%s3 + $0x100] sm:$0xff]
  %v292 = vld [vmem:[%s3 + $0x108] sm:$0xff]
  %v293 = vld [vmem:[%s3 + $0x110] sm:$0xff]
  %v294 = vld [vmem:[%s3 + $0x118] sm:$0xff]
  %v295 = vld [vmem:[%s3 + $0x120] sm:$0xff]
  %v296 = vld [vmem:[%s3 + $0x128] sm:$0xff]
  %v297 = vld [vmem:[%s3 + $0x130] sm:$0xff]
  %v298 = vld [vmem:[%s3 + $0x138] sm:$0xff]
  %v299 = vld [vmem:[%s3 + $0x140] sm:$0xff]
  %v300 = vld [vmem:[%s3 + $0x148] sm:$0xff]
  %v301 = vld [vmem:[%s3 + $0x150] sm:$0xff]
  %v302 = vld [vmem:[%s3 + $0x158] sm:$0xff]
  %v303 = vld [vmem:[%s3 + $0x160] sm:$0xff]
  %v304 = vld [vmem:[%s3 + $0x168] sm:$0xff]
  %v305 = vld [vmem:[%s3 + $0x170] sm:$0xff]
  %v306 = vld [vmem:[%s3 + $0x178] sm:$0xff]
  %v307 = vld [vmem:[%s3 + $0x180] sm:$0xff]
  %v308 = vld [vmem:[%s3 + $0x188] sm:$0xff]
  %v309 = vld [vmem:[%s3 + $0x190] sm:$0xff]
  %v310 = vld [vmem:[%s3 + $0x198] sm:$0xff]
  %v311 = vld [vmem:[%s3 + $0x1a0] sm:$0xff]
  %v312 = vld [vmem:[%s3 + $0x1a8] sm:$0xff]
  %v313 = vld [vmem:[%s3 + $0x1b0] sm:$0xff]
  %v314 = vld [vmem:[%s3 + $0x1b8] sm:$0xff]
  %v315 = vld [vmem:[%s3 + $0x1c0] sm:$0xff]
  %v316 = vld [vmem:[%s3 + $0x1c8] sm:$0xff]
  %v317 = vld [vmem:[%s3 + $0x1d0] sm:$0xff]
  %v318 = vld [vmem:[%s3 + $0x1d8] sm:$0xff]
  %v319 = vld [vmem:[%s3 + $0x1e0] sm:$0xff]
  %v320 = vld [vmem:[%s3 + $0x1e8] sm:$0xff]
  %v321 = vld [vmem:[%s3 + $0x1f0] sm:$0xff]
  %v322 = vld [vmem:[%s3 + $0x1f8] sm:$0xff]
  %v323 = vld [vmem:[%s3 + $0x200] sm:$0xff]
  %v324 = vld [vmem:[%s3 + $0x208] sm:$0xff]
  %v325 = vld [vmem:[%s3 + $0x210] sm:$0xff]
  %v326 = vld [vmem:[%s3 + $0x218] sm:$0xff]
  %v327 = vld [vmem:[%s3 + $0x220] sm:$0xff]
  %v328 = vld [vmem:[%s3 + $0x228] sm:$0xff]
  %v329 = vld [vmem:[%s3 + $0x230] sm:$0xff]
  %v330 = vld [vmem:[%s3 + $0x238] sm:$0xff]
  %v331 = vld [vmem:[%s3 + $0x240] sm:$0xff]
  %v332 = vld [vmem:[%s3 + $0x248] sm:$0xff]
  %v333 = vld [vmem:[%s3 + $0x250] sm:$0xff]
  %v334 = vld [vmem:[%s3 + $0x258] sm:$0xff]
  %v335 = vld [vmem:[%s3 + $0x260] sm:$0xff]
  %v336 = vld [vmem:[%s3 + $0x268] sm:$0xff]
  %v337 = vld [vmem:[%s3 + $0x270] sm:$0xff]
  %v338 = vld [vmem:[%s3 + $0x278] sm:$0xff]
  %v339 = vld [vmem:[%s3 + $0x280] sm:$0xff]
  %v340 = vld [vmem:[%s3 + $0x288] sm:$0xff]
  %v341 = vld [vmem:[%s3 + $0x290] sm:$0xff]
  %v342 = vld [vmem:[%s3 + $0x298] sm:$0xff]
  %v343 = vld [vmem:[%s3 + $0x2a0] sm:$0xff]
  %v344 = vld [vmem:[%s3 + $0x2a8] sm:$0xff]
  %v345 = vld [vmem:[%s3 + $0x2b0] sm:$0xff]
  %v346 = vld [vmem:[%s3 + $0x2b8] sm:$0xff]
  %v347 = vld [vmem:[%s3 + $0x2c0] sm:$0xff]
  %v348 = vld [vmem:[%s3 + $0x2c8] sm:$0xff]
  %v349 = vld [vmem:[%s3 + $0x2d0] sm:$0xff]
  %v350 = vld [vmem:[%s3 + $0x2d8] sm:$0xff]
  %v351 = vld [vmem:[%s3 + $0x2e0] sm:$0xff]
  %v352 = vld [vmem:[%s3 + $0x2e8] sm:$0xff]
  %v353 = vld [vmem:[%s3 + $0x2f0] sm:$0xff]
  %v354 = vld [vmem:[%s3 + $0x2f8] sm:$0xff]
  %v355 = vld [vmem:[%s3 + $0x300] sm:$0xff]
  %v356 = vld [vmem:[%s3 + $0x308] sm:$0xff]
  %v357 = vld [vmem:[%s3 + $0x310] sm:$0xff]
  %v358 = vld [vmem:[%s3 + $0x318] sm:$0xff]
  %v359 = vld [vmem:[%s3 + $0x320] sm:$0xff]
  %v360 = vld [vmem:[%s3 + $0x328] sm:$0xff]
  %v361 = vld [vmem:[%s3 + $0x330] sm:$0xff]
  %v362 = vld [vmem:[%s3 + $0x338] sm:$0xff]
  %v363 = vld [vmem:[%s3 + $0x340] sm:$0xff]
  %v364 = vld [vmem:[%s3 + $0x348] sm:$0xff]
  %v365 = vld [vmem:[%s3 + $0x350] sm:$0xff]
  %v366 = vld [vmem:[%s3 + $0x358] sm:$0xff]
  %v367 = vld [vmem:[%s3 + $0x360] sm:$0xff]
  %v368 = vld [vmem:[%s3 + $0x368] sm:$0xff]
  %v369 = vld [vmem:[%s3 + $0x370] sm:$0xff]
  %v370 = vld [vmem:[%s3 + $0x378] sm:$0xff]
  %v371 = vld [vmem:[%s3 + $0x380] sm:$0xff]
  %v372 = vld [vmem:[%s3 + $0x388] sm:$0xff]
  %v373 = vld [vmem:[%s3 + $0x390] sm:$0xff]
  %v374 = vld [vmem:[%s3 + $0x398] sm:$0xff]
  %v375 = vld [vmem:[%s3 + $0x3a0] sm:$0xff]
  %v376 = vld [vmem:[%s3 + $0x3a8] sm:$0xff]
  %v377 = vld [vmem:[%s3 + $0x3b0] sm:$0xff]
  %v378 = vld [vmem:[%s3 + $0x3b8] sm:$0xff]
  %v379 = vld [vmem:[%s3 + $0x3c0] sm:$0xff]
  %v380 = vld [vmem:[%s3 + $0x3c8] sm:$0xff]
  %v381 = vld [vmem:[%s3 + $0x3d0] sm:$0xff]
  %v382 = vld [vmem:[%s3 + $0x3d8] sm:$0xff]
  %v383 = vld [vmem:[%s3 + $0x3e0] sm:$0xff]
  %v384 = vld [vmem:[%s3 + $0x3e8] sm:$0xff]
  %v385 = vld [vmem:[%s3 + $0x3f0] sm:$0xff]
  %v386 = vld [vmem:[%s3 + $0x3f8] sm:$0xff]
  %v387 = vld [vmem:[%s3 + $0x400] sm:$0xff]
  %v388 = vld [vmem:[%s3 + $0x408] sm:$0xff]
  %v389 = vld [vmem:[%s3 + $0x410] sm:$0xff]
  %v390 = vld [vmem:[%s3 + $0x418] sm:$0xff]
  %v391 = vld [vmem:[%s3 + $0x420] sm:$0xff]
  %v392 = vld [vmem:[%s3 + $0x428] sm:$0xff]
  %v393 = vld [vmem:[%s3 + $0x430] sm:$0xff]
  %v394 = vld [vmem:[%s3 + $0x438] sm:$0xff]
  %v395 = vld [vmem:[%s3 + $0x440] sm:$0xff]
  %v396 = vld [vmem:[%s3 + $0x448] sm:$0xff]
  %v397 = vld [vmem:[%s3 + $0x450] sm:$0xff]
  %v398 = vld [vmem:[%s3 + $0x458] sm:$0xff]
  %v399 = vld [vmem:[%s3 + $0x460] sm:$0xff]
  %v400 = vld [vmem:[%s3 + $0x468] sm:$0xff]
  %v401 = vld [vmem:[%s3 + $0x470] sm:$0xff]
  %v402 = vld [vmem:[%s3 + $0x478] sm:$0xff]
  %v403 = vld [vmem:[%s3 + $0x480] sm:$0xff]
  %v404 = vld [vmem:[%s3 + $0x488] sm:$0xff]
  %v405 = vld [vmem:[%s3 + $0x490] sm:$0xff]
  %v406 = vld [vmem:[%s3 + $0x498] sm:$0xff]
  %v407 = vld [vmem:[%s3 + $0x4a0] sm:$0xff]
  %v408 = vld [vmem:[%s3 + $0x4a8] sm:$0xff]
  %v409 = vld [vmem:[%s3 + $0x4b0] sm:$0xff]
  %v410 = vld [vmem:[%s3 + $0x4b8] sm:$0xff]
  %v411 = vld [vmem:[%s3 + $0x4c0] sm:$0xff]
  %v412 = vld [vmem:[%s3 + $0x4c8] sm:$0xff]
  %v413 = vld [vmem:[%s3 + $0x4d0] sm:$0xff]
  %v414 = vld [vmem:[%s3 + $0x4d8] sm:$0xff]
  %v415 = vld [vmem:[%s3 + $0x4e0] sm:$0xff]
  %v416 = vld [vmem:[%s3 + $0x4e8] sm:$0xff]
  %v417 = vld [vmem:[%s3 + $0x4f0] sm:$0xff]
  %v418 = vld [vmem:[%s3 + $0x4f8] sm:$0xff]
  %v419 = vld [vmem:[%s3 + $0x500] sm:$0xff]
  %v420 = vld [vmem:[%s3 + $0x508] sm:$0xff]
  %v421 = vld [vmem:[%s3 + $0x510] sm:$0xff]
  %v422 = vld [vmem:[%s3 + $0x518] sm:$0xff]
  %v423 = vld [vmem:[%s3 + $0x520] sm:$0xff]
  %v424 = vld [vmem:[%s3 + $0x528] sm:$0xff]
  %v425 = vld [vmem:[%s3 + $0x530] sm:$0xff]
  %v426 = vld [vmem:[%s3 + $0x538] sm:$0xff]
  %v427 = vld [vmem:[%s3 + $0x540] sm:$0xff]
  %v428 = vld [vmem:[%s3 + $0x548] sm:$0xff]
  %v429 = vld [vmem:[%s3 + $0x550] sm:$0xff]
  %v430 = vld [vmem:[%s3 + $0x558] sm:$0xff]
  %v431 = vld [vmem:[%s3 + $0x560] sm:$0xff]
  %v432 = vld [vmem:[%s3 + $0x568] sm:$0xff]
  %v433 = vld [vmem:[%s3 + $0x570] sm:$0xff]
  %v434 = vld [vmem:[%s3 + $0x578] sm:$0xff]
  %v435 = vld [vmem:[%s3 + $0x580] sm:$0xff]
  %v436 = vld [vmem:[%s3 + $0x588] sm:$0xff]
  %v437 = vld [vmem:[%s3 + $0x590] sm:$0xff]
  %v438 = vld [vmem:[%s3 + $0x598] sm:$0xff]
  %v439 = vld [vmem:[%s3 + $0x5a0] sm:$0xff]
  %v440 = vld [vmem:[%s3 + $0x5a8] sm:$0xff]
  %v441 = vld [vmem:[%s3 + $0x5b0] sm:$0xff]
  %v442 = vld [vmem:[%s3 + $0x5b8] sm:$0xff]
  %v443 = vld [vmem:[%s3 + $0x5c0] sm:$0xff]
  %v444 = vld [vmem:[%s3 + $0x5c8] sm:$0xff]
  %v445 = vld [vmem:[%s3 + $0x5d0] sm:$0xff]
  %v446 = vld [vmem:[%s3 + $0x5d8] sm:$0xff]
  %v447 = vld [vmem:[%s3 + $0x5e0] sm:$0xff]
  %v448 = vld [vmem:[%s3 + $0x5e8] sm:$0xff]
  %v449 = vld [vmem:[%s3 + $0x5f0] sm:$0xff]
  %v450 = vld [vmem:[%s3 + $0x5f8] sm:$0xff]
  %v451 = vld [vmem:[%s3 + $0x600] sm:$0xff]
  %v452 = vld [vmem:[%s3 + $0x608] sm:$0xff]
  %v453 = vld [vmem:[%s3 + $0x610] sm:$0xff]
  %v454 = vld [vmem:[%s3 + $0x618] sm:$0xff]
  %v455 = vld [vmem:[%s3 + $0x620] sm:$0xff]
  %v456 = vld [vmem:[%s3 + $0x628] sm:$0xff]
  %v457 = vld [vmem:[%s3 + $0x630] sm:$0xff]
  %v458 = vld [vmem:[%s3 + $0x638] sm:$0xff]
  %v459 = vld [vmem:[%s3 + $0x640] sm:$0xff]
  %v460 = vld [vmem:[%s3 + $0x648] sm:$0xff]
  %v461 = vld [vmem:[%s3 + $0x650] sm:$0xff]
  %v462 = vld [vmem:[%s3 + $0x658] sm:$0xff]
  %v463 = vld [vmem:[%s3 + $0x660] sm:$0xff]
  %v464 = vld [vmem:[%s3 + $0x668] sm:$0xff]
  %v465 = vld [vmem:[%s3 + $0x670] sm:$0xff]
  %v466 = vld [vmem:[%s3 + $0x678] sm:$0xff]
  %v467 = vld [vmem:[%s3 + $0x680] sm:$0xff]
  %v468 = vld [vmem:[%s3 + $0x688] sm:$0xff]
  %v469 = vld [vmem:[%s3 + $0x690] sm:$0xff]
  %v470 = vld [vmem:[%s3 + $0x698] sm:$0xff]
  %v471 = vld [vmem:[%s3 + $0x6a0] sm:$0xff]
  %v472 = vld [vmem:[%s3 + $0x6a8] sm:$0xff]
  %v473 = vld [vmem:[%s3 + $0x6b0] sm:$0xff]
  %v474 = vld [vmem:[%s3 + $0x6b8] sm:$0xff]
  %v475 = vld [vmem:[%s3 + $0x6c0] sm:$0xff]
  %v476 = vld [vmem:[%s3 + $0x6c8] sm:$0xff]
  %v477 = vld [vmem:[%s3 + $0x6d0] sm:$0xff]
  %v478 = vld [vmem:[%s3 + $0x6d8] sm:$0xff]
  %v479 = vld [vmem:[%s3 + $0x6e0] sm:$0xff]
  %v480 = vld [vmem:[%s3 + $0x6e8] sm:$0xff]
  %v481 = vld [vmem:[%s3 + $0x6f0] sm:$0xff]
  %v482 = vld [vmem:[%s3 + $0x6f8] sm:$0xff]
  %v483 = vld [vmem:[%s3 + $0x700] sm:$0xff]
  %v484 = vld [vmem:[%s3 + $0x708] sm:$0xff]
  %v485 = vld [vmem:[%s3 + $0x710] sm:$0xff]
  %v486 = vld [vmem:[%s3 + $0x718] sm:$0xff]
  %v487 = vld [vmem:[%s3 + $0x720] sm:$0xff]
  %v488 = vld [vmem:[%s3 + $0x728] sm:$0xff]
  %v489 = vld [vmem:[%s3 + $0x730] sm:$0xff]
  %v490 = vld [vmem:[%s3 + $0x738] sm:$0xff]
  %v491 = vld [vmem:[%s3 + $0x740] sm:$0xff]
  %v492 = vld [vmem:[%s3 + $0x748] sm:$0xff]
  %v493 = vld [vmem:[%s3 + $0x750] sm:$0xff]
  %v494 = vld [vmem:[%s3 + $0x758] sm:$0xff]
  %v495 = vld [vmem:[%s3 + $0x760] sm:$0xff]
  %v496 = vld [vmem:[%s3 + $0x768] sm:$0xff]
  %v497 = vld [vmem:[%s3 + $0x770] sm:$0xff]
  %v498 = vld [vmem:[%s3 + $0x778] sm:$0xff]
  %v499 = vld [vmem:[%s3 + $0x780] sm:$0xff]
  %v500 = vld [vmem:[%s3 + $0x788] sm:$0xff]
  %v501 = vld [vmem:[%s3 + $0x790] sm:$0xff]
  %v502 = vld [vmem:[%s3 + $0x798] sm:$0xff]
  %v503 = vld [vmem:[%s3 + $0x7a0] sm:$0xff]
  %v504 = vld [vmem:[%s3 + $0x7a8] sm:$0xff]
  %v505 = vld [vmem:[%s3 + $0x7b0] sm:$0xff]
  %v506 = vld [vmem:[%s3 + $0x7b8] sm:$0xff]
  %v507 = vld [vmem:[%s3 + $0x7c0] sm:$0xff]
  %v508 = vld [vmem:[%s3 + $0x7c8] sm:$0xff]
  %v509 = vld [vmem:[%s3 + $0x7d0] sm:$0xff]
  %v510 = vld [vmem:[%s3 + $0x7d8] sm:$0xff]
  %v511 = vld [vmem:[%s3 + $0x7e0] sm:$0xff]
  %v512 = vld [vmem:[%s3 + $0x7e8] sm:$0xff]
  %v513 = vld [vmem:[%s3 + $0x7f0] sm:$0xff]
  %v514 = vld [vmem:[%s3 + $0x7f8] sm:$0xff]
  %v515 = vld [vmem:[%s3 + $0x800] sm:$0xff]
  %v516 = vld [vmem:[%s3 + $0x808] sm:$0xff]
  %v517 = vld [vmem:[%s3 + $0x810] sm:$0xff]
  %v518 = vld [vmem:[%s3 + $0x818] sm:$0xff]
  %v519 = vld [vmem:[%s3 + $0x820] sm:$0xff]
  %v520 = vld [vmem:[%s3 + $0x828] sm:$0xff]
  %v521 = vld [vmem:[%s3 + $0x830] sm:$0xff]
  %v522 = vld [vmem:[%s3 + $0x838] sm:$0xff]
  %v523 = vld [vmem:[%s3 + $0x840] sm:$0xff]
  %v524 = vld [vmem:[%s3 + $0x848] sm:$0xff]
  %v525 = vld [vmem:[%s3 + $0x850] sm:$0xff]
  %v526 = vld [vmem:[%s3 + $0x858] sm:$0xff]
  %v527 = vld [vmem:[%s3 + $0x860] sm:$0xff]
  %v528 = vld [vmem:[%s3 + $0x868] sm:$0xff]
  %v529 = vld [vmem:[%s3 + $0x870] sm:$0xff]
  %v530 = vld [vmem:[%s3 + $0x878] sm:$0xff]
  %v531 = vld [vmem:[%s3 + $0x880] sm:$0xff]
  %v532 = vld [vmem:[%s3 + $0x888] sm:$0xff]
  %v533 = vld [vmem:[%s3 + $0x890] sm:$0xff]
  %v534 = vld [vmem:[%s3 + $0x898] sm:$0xff]
  %v535 = vld [vmem:[%s3 + $0x8a0] sm:$0xff]
  %v536 = vld [vmem:[%s3 + $0x8a8] sm:$0xff]
  %v537 = vld [vmem:[%s3 + $0x8b0] sm:$0xff]
  %v538 = vld [vmem:[%s3 + $0x8b8] sm:$0xff]
  %v539 = vld [vmem:[%s3 + $0x8c0] sm:$0xff]
  %v540 = vld [vmem:[%s3 + $0x8c8] sm:$0xff]
  %v541 = vld [vmem:[%s3 + $0x8d0] sm:$0xff]
  %v542 = vld [vmem:[%s3 + $0x8d8] sm:$0xff]
  %v543 = vld [vmem:[%s3 + $0x8e0] sm:$0xff]
  %v544 = vld [vmem:[%s3 + $0x8e8] sm:$0xff]
  %v545 = vld [vmem:[%s3 + $0x8f0] sm:$0xff]
  %v546 = vld [vmem:[%s3 + $0x8f8] sm:$0xff]
  %v547 = vld [vmem:[%s3 + $0x900] sm:$0xff]
  %v548 = vld [vmem:[%s3 + $0x908] sm:$0xff]
  %v549 = vld [vmem:[%s3 + $0x910] sm:$0xff]
  %v550 = vld [vmem:[%s3 + $0x918] sm:$0xff]
  %v551 = vld [vmem:[%s3 + $0x920] sm:$0xff]
  %v552 = vld [vmem:[%s3 + $0x928] sm:$0xff]
  %v553 = vld [vmem:[%s3 + $0x930] sm:$0xff]
  %v554 = vld [vmem:[%s3 + $0x938] sm:$0xff]
  %v555 = vld [vmem:[%s3 + $0x940] sm:$0xff]
  %v556 = vld [vmem:[%s3 + $0x948] sm:$0xff]
  %v557 = vld [vmem:[%s3 + $0x950] sm:$0xff]
  %v558 = vld [vmem:[%s3 + $0x958] sm:$0xff]
  %v559 = vld [vmem:[%s3 + $0x960] sm:$0xff]
  %v560 = vld [vmem:[%s3 + $0x968] sm:$0xff]
  %v561 = vld [vmem:[%s3 + $0x970] sm:$0xff]
  %v562 = vld [vmem:[%s3 + $0x978] sm:$0xff]
  %v563 = vld [vmem:[%s3 + $0x980] sm:$0xff]
  %v564 = vld [vmem:[%s3 + $0x988] sm:$0xff]
  %v565 = vld [vmem:[%s3 + $0x990] sm:$0xff]
  %v566 = vld [vmem:[%s3 + $0x998] sm:$0xff]
  %v567 = vld [vmem:[%s3 + $0x9a0] sm:$0xff]
  %v568 = vld [vmem:[%s3 + $0x9a8] sm:$0xff]
  %v569 = vld [vmem:[%s3 + $0x9b0] sm:$0xff]
  %v570 = vld [vmem:[%s3 + $0x9b8] sm:$0xff]
  %v571 = vld [vmem:[%s3 + $0x9c0] sm:$0xff]
  %v572 = vld [vmem:[%s3 + $0x9c8] sm:$0xff]
  %v573 = vld [vmem:[%s3 + $0x9d0] sm:$0xff]
  %v574 = vld [vmem:[%s3 + $0x9d8] sm:$0xff]
  %v575 = vld [vmem:[%s3 + $0x9e0] sm:$0xff]
  %v576 = vld [vmem:[%s3 + $0x9e8] sm:$0xff]
  %v577 = vld [vmem:[%s3 + $0x9f0] sm:$0xff]
  %v578 = vld [vmem:[%s3 + $0x9f8] sm:$0xff]
  %v579 = vld [vmem:[%s3 + $0xa00] sm:$0xff]
  %v580 = vld [vmem:[%s3 + $0xa08] sm:$0xff]
  %v581 = vld [vmem:[%s3 + $0xa10] sm:$0xff]
  %v582 = vld [vmem:[%s3 + $0xa18] sm:$0xff]
  %v583 = vld [vmem:[%s3 + $0xa20] sm:$0xff]
  %v584 = vld [vmem:[%s3 + $0xa28] sm:$0xff]
  %v585 = vld [vmem:[%s3 + $0xa30] sm:$0xff]
  %v586 = vld [vmem:[%s3 + $0xa38] sm:$0xff]
  %v587 = vld [vmem:[%s3 + $0xa40] sm:$0xff]
  %v588 = vld [vmem:[%s3 + $0xa48] sm:$0xff]
  %v589 = vld [vmem:[%s3 + $0xa50] sm:$0xff]
  %v590 = vld [vmem:[%s3 + $0xa58] sm:$0xff]
  %v591 = vld [vmem:[%s3 + $0xa60] sm:$0xff]
  %v592 = vld [vmem:[%s3 + $0xa68] sm:$0xff]
  %v593 = vld [vmem:[%s3 + $0xa70] sm:$0xff]
  %v594 = vld [vmem:[%s3 + $0xa78] sm:$0xff]
  %v595 = vld [vmem:[%s3 + $0xa80] sm:$0xff]
  %v596 = vld [vmem:[%s3 + $0xa88] sm:$0xff]
  %v597 = vld [vmem:[%s3 + $0xa90] sm:$0xff]
  %v598 = vld [vmem:[%s3 + $0xa98] sm:$0xff]
  %v599 = vld [vmem:[%s3 + $0xaa0] sm:$0xff]
  %v600 = vld [vmem:[%s3 + $0xaa8] sm:$0xff]
  %v601 = vld [vmem:[%s3 + $0xab0] sm:$0xff]
  %v602 = vld [vmem:[%s3 + $0xab8] sm:$0xff]
  %v603 = vld [vmem:[%s3 + $0xac0] sm:$0xff]
  %v604 = vld [vmem:[%s3 + $0xac8] sm:$0xff]
  %v605 = vld [vmem:[%s3 + $0xad0] sm:$0xff]
  %v606 = vld [vmem:[%s3 + $0xad8] sm:$0xff]
  %v607 = vld [vmem:[%s3 + $0xae0] sm:$0xff]
  %v608 = vld [vmem:[%s3 + $0xae8] sm:$0xff]
  %v609 = vld [vmem:[%s3 + $0xaf0] sm:$0xff]
  %v610 = vld [vmem:[%s3 + $0xaf8] sm:$0xff]
  %v611 = vld [vmem:[%s3 + $0xb00] sm:$0xff]
  %v612 = vld [vmem:[%s3 + $0xb08] sm:$0xff]
  %v613 = vld [vmem:[%s3 + $0xb10] sm:$0xff]
  %v614 = vld [vmem:[%s3 + $0xb18] sm:$0xff]
  %v615 = vld [vmem:[%s3 + $0xb20] sm:$0xff]
  %v616 = vld [vmem:[%s3 + $0xb28] sm:$0xff]
  %v617 = vld [vmem:[%s3 + $0xb30] sm:$0xff]
  %v618 = vld [vmem:[%s3 + $0xb38] sm:$0xff]
  %v619 = vld [vmem:[%s3 + $0xb40] sm:$0xff]
  %v620 = vld [vmem:[%s3 + $0xb48] sm:$0xff]
  %v621 = vld [vmem:[%s3 + $0xb50] sm:$0xff]
  %v622 = vld [vmem:[%s3 + $0xb58] sm:$0xff]
  %v623 = vld [vmem:[%s3 + $0xb60] sm:$0xff]
  %v624 = vld [vmem:[%s3 + $0xb68] sm:$0xff]
  %v625 = vld [vmem:[%s3 + $0xb70] sm:$0xff]
  %v626 = vld [vmem:[%s3 + $0xb78] sm:$0xff]
  %v627 = vld [vmem:[%s3 + $0xb80] sm:$0xff]
  %v628 = vld [vmem:[%s3 + $0xb88] sm:$0xff]
  %v629 = vld [vmem:[%s3 + $0xb90] sm:$0xff]
  %v630 = vld [vmem:[%s3 + $0xb98] sm:$0xff]
  %v631 = vld [vmem:[%s3 + $0xba0] sm:$0xff]
  %v632 = vld [vmem:[%s3 + $0xba8] sm:$0xff]
  %v633 = vld [vmem:[%s3 + $0xbb0] sm:$0xff]
  %v634 = vld [vmem:[%s3 + $0xbb8] sm:$0xff]
  %v635 = vld [vmem:[%s3 + $0xbc0] sm:$0xff]
  %v636 = vld [vmem:[%s3 + $0xbc8] sm:$0xff]
  %v637 = vld [vmem:[%s3 + $0xbd0] sm:$0xff]
  %v638 = vld [vmem:[%s3 + $0xbd8] sm:$0xff]
  %v639 = vld [vmem:[%s3 + $0xbe0] sm:$0xff]
  %v640 = vld [vmem:[%s3 + $0xbe8] sm:$0xff]
  %v641 = vld [vmem:[%s3 + $0xbf0] sm:$0xff]
  %v642 = vld [vmem:[%s3 + $0xbf8] sm:$0xff]
  %v643 = vld [vmem:[%s4] sm:$0x3f]
  %v645 = vlaneseq
  %v646 = vshrl.u32 %v645, 7
  %v647 = vsub.s32 0, %v646
  %v648 = vrot.slane %v643, %v647
  %v649 = vlaneseq
  %v650 = vshrl.u32 %v649, 7
  %v651 = vsub.s32 1, %v650
  %v652 = vrot.slane %v643, %v651
  %v653 = vlaneseq
  %v654 = vshrl.u32 %v653, 7
  %v655 = vsub.s32 2, %v654
  %v656 = vrot.slane %v643, %v655
  %v657 = vlaneseq
  %v658 = vshrl.u32 %v657, 7
  %v659 = vsub.s32 3, %v658
  %v660 = vrot.slane %v643, %v659
  %v661 = vlaneseq
  %v662 = vshrl.u32 %v661, 7
  %v663 = vsub.s32 4, %v662
  %v664 = vrot.slane %v643, %v663
  %v665 = vlaneseq
  %v666 = vshrl.u32 %v665, 7
  %v667 = vsub.s32 5, %v666
  %v668 = vrot.slane %v643, %v667
  %675 = vmatprep.subr.mxu0 %v260
  %676 = vmatpush1.msra.mxu0 %v259
  %677 = vmatprep.subr.mxu0 %v266
  %678 = vmatpush1.msra.mxu0 %v265
  %679 = vmatprep.subr.mxu0 %v272
  %680 = vmatpush1.msra.mxu0 %v271
  %681 = vmatprep.subr.mxu0 %v278
  %682 = vmatpush1.msra.mxu0 %v277
  %683 = vmatprep.subr.mxu0 %v284
  %684 = vmatpush1.msra.mxu0 %v283
  %685 = vmatprep.subr.mxu0 %v290
  %686 = vmatpush1.msra.mxu0 %v289
  %687 = vmatprep.subr.mxu0 %v296
  %688 = vmatpush1.msra.mxu0 %v295
  %689 = vmatprep.subr.mxu0 %v302
  %690 = vmatpush1.msra.mxu0 %v301
  %691 = vmatprep.subr.mxu0 %v308
  %692 = vmatpush1.msra.mxu0 %v307
  %693 = vmatprep.subr.mxu0 %v314
  %694 = vmatpush1.msra.mxu0 %v313
  %695 = vmatprep.subr.mxu0 %v320
  %696 = vmatpush1.msra.mxu0 %v319
  %697 = vmatprep.subr.mxu0 %v326
  %698 = vmatpush1.msra.mxu0 %v325
  %699 = vmatprep.subr.mxu0 %v332
  %700 = vmatpush1.msra.mxu0 %v331
  %701 = vmatprep.subr.mxu0 %v338
  %702 = vmatpush1.msra.mxu0 %v337
  %703 = vmatprep.subr.mxu0 %v344
  %704 = vmatpush1.msra.mxu0 %v343
  %705 = vmatprep.subr.mxu0 %v350
  %706 = vmatpush1.msra.mxu0 %v349
  %707 = vmatprep.subr.mxu0 %v356
  %708 = vmatpush1.msra.mxu0 %v355
  %709 = vmatprep.subr.mxu0 %v362
  %710 = vmatpush1.msra.mxu0 %v361
  %711 = vmatprep.subr.mxu0 %v368
  %712 = vmatpush1.msra.mxu0 %v367
  %713 = vmatprep.subr.mxu0 %v374
  %714 = vmatpush1.msra.mxu0 %v373
  %715 = vmatprep.subr.mxu0 %v380
  %716 = vmatpush1.msra.mxu0 %v379
  %717 = vmatprep.subr.mxu0 %v386
  %718 = vmatpush1.msra.mxu0 %v385
  %719 = vmatprep.subr.mxu0 %v392
  %720 = vmatpush1.msra.mxu0 %v391
  %721 = vmatprep.subr.mxu0 %v398
  %722 = vmatpush1.msra.mxu0 %v397
  %723 = vmatprep.subr.mxu0 %v404
  %724 = vmatpush1.msra.mxu0 %v403
  %725 = vmatprep.subr.mxu0 %v410
  %726 = vmatpush1.msra.mxu0 %v409
  %727 = vmatprep.subr.mxu0 %v416
  %728 = vmatpush1.msra.mxu0 %v415
  %729 = vmatprep.subr.mxu0 %v422
  %730 = vmatpush1.msra.mxu0 %v421
  %731 = vmatprep.subr.mxu0 %v428
  %732 = vmatpush1.msra.mxu0 %v427
  %733 = vmatprep.subr.mxu0 %v434
  %734 = vmatpush1.msra.mxu0 %v433
  %735 = vmatprep.subr.mxu0 %v440
  %736 = vmatpush1.msra.mxu0 %v439
  %737 = vmatprep.subr.mxu0 %v446
  %738 = vmatpush1.msra.mxu0 %v445
  %739 = vmatprep.mubr.f32.mxu0 %v256
  %740 = vmatmul.mubr.f32.gmra.mrb[0].mxu0 %v255
  %v741 = vpop.f32.mrb[0].mxu0
  %v742 = vadd.f32 %v648, %v741
  %v743 = vpop.f32.mrb[0].mxu0
  %v744 = vadd.f32 %v652, %v743
  %745 = vdwg.mxu0
  %746 = vmatprep.subr.mxu0 %v452
  %747 = vmatpush1.msra.mxu0 %v451
  %748 = vmatprep.subr.mxu0 %v458
  %749 = vmatpush1.msra.mxu0 %v457
  %750 = vmatprep.subr.mxu0 %v464
  %751 = vmatpush1.msra.mxu0 %v463
  %752 = vmatprep.subr.mxu0 %v470
  %753 = vmatpush1.msra.mxu0 %v469
  %754 = vmatprep.subr.mxu0 %v476
  %755 = vmatpush1.msra.mxu0 %v475
  %756 = vmatprep.subr.mxu0 %v482
  %757 = vmatpush1.msra.mxu0 %v481
  %758 = vmatprep.subr.mxu0 %v488
  %759 = vmatpush1.msra.mxu0 %v487
  %760 = vmatprep.subr.mxu0 %v494
  %761 = vmatpush1.msra.mxu0 %v493
  %762 = vmatprep.subr.mxu0 %v500
  %763 = vmatpush1.msra.mxu0 %v499
  %764 = vmatprep.subr.mxu0 %v506
  %765 = vmatpush1.msra.mxu0 %v505
  %766 = vmatprep.subr.mxu0 %v512
  %767 = vmatpush1.msra.mxu0 %v511
  %768 = vmatprep.subr.mxu0 %v518
  %769 = vmatpush1.msra.mxu0 %v517
  %770 = vmatprep.subr.mxu0 %v524
  %771 = vmatpush1.msra.mxu0 %v523
  %772 = vmatprep.subr.mxu0 %v530
  %773 = vmatpush1.msra.mxu0 %v529
  %774 = vmatprep.subr.mxu0 %v536
  %775 = vmatpush1.msra.mxu0 %v535
  %776 = vmatprep.subr.mxu0 %v542
  %777 = vmatpush1.msra.mxu0 %v541
  %778 = vmatprep.subr.mxu0 %v548
  %779 = vmatpush1.msra.mxu0 %v547
  %780 = vmatprep.subr.mxu0 %v554
  %781 = vmatpush1.msra.mxu0 %v553
  %782 = vmatprep.subr.mxu0 %v560
  %783 = vmatpush1.msra.mxu0 %v559
  %784 = vmatprep.subr.mxu0 %v566
  %785 = vmatpush1.msra.mxu0 %v565
  %786 = vmatprep.subr.mxu0 %v572
  %787 = vmatpush1.msra.mxu0 %v571
  %788 = vmatprep.subr.mxu0 %v578
  %789 = vmatpush1.msra.mxu0 %v577
  %790 = vmatprep.subr.mxu0 %v584
  %791 = vmatpush1.msra.mxu0 %v583
  %792 = vmatprep.subr.mxu0 %v590
  %793 = vmatpush1.msra.mxu0 %v589
  %794 = vmatprep.subr.mxu0 %v596
  %795 = vmatpush1.msra.mxu0 %v595
  %796 = vmatprep.subr.mxu0 %v602
  %797 = vmatpush1.msra.mxu0 %v601
  %798 = vmatprep.subr.mxu0 %v608
  %799 = vmatpush1.msra.mxu0 %v607
  %800 = vmatprep.subr.mxu0 %v614
  %801 = vmatpush1.msra.mxu0 %v613
  %802 = vmatprep.subr.mxu0 %v620
  %803 = vmatpush1.msra.mxu0 %v619
  %804 = vmatprep.subr.mxu0 %v626
  %805 = vmatpush1.msra.mxu0 %v625
  %806 = vmatprep.subr.mxu0 %v632
  %807 = vmatpush1.msra.mxu0 %v631
  %808 = vmatprep.subr.mxu0 %v638
  %809 = vmatpush1.msra.mxu0 %v637
  %810 = vmatprep.mubr.f32.mxu0 %v258
  %811 = vmatmul.mubr.f32.gmra.mrb[0].mxu0 %v257
  %v812 = vpop.f32.mrb[0].mxu0
  %v813 = vadd.f32 %v742, %v812
  %v814 = vpop.f32.mrb[0].mxu0
  %v815 = vadd.f32 %v744, %v814
  %816 = vdwg.mxu0
  %817 = vmatprep.subr.mxu0 %v262
  %818 = vmatpush1.msra.mxu0 %v261
  %819 = vmatprep.subr.mxu0 %v268
  %820 = vmatpush1.msra.mxu0 %v267
  %821 = vmatprep.subr.mxu0 %v274
  %822 = vmatpush1.msra.mxu0 %v273
  %823 = vmatprep.subr.mxu0 %v280
  %824 = vmatpush1.msra.mxu0 %v279
  %825 = vmatprep.subr.mxu0 %v286
  %826 = vmatpush1.msra.mxu0 %v285
  %827 = vmatprep.subr.mxu0 %v292
  %828 = vmatpush1.msra.mxu0 %v291
  %829 = vmatprep.subr.mxu0 %v298
  %830 = vmatpush1.msra.mxu0 %v297
  %831 = vmatprep.subr.mxu0 %v304
  %832 = vmatpush1.msra.mxu0 %v303
  %833 = vmatprep.subr.mxu0 %v310
  %834 = vmatpush1.msra.mxu0 %v309
  %835 = vmatprep.subr.mxu0 %v316
  %836 = vmatpush1.msra.mxu0 %v315
  %837 = vmatprep.subr.mxu0 %v322
  %838 = vmatpush1.msra.mxu0 %v321
  %839 = vmatprep.subr.mxu0 %v328
  %840 = vmatpush1.msra.mxu0 %v327
  %841 = vmatprep.subr.mxu0 %v334
  %842 = vmatpush1.msra.mxu0 %v333
  %843 = vmatprep.subr.mxu0 %v340
  %844 = vmatpush1.msra.mxu0 %v339
  %845 = vmatprep.subr.mxu0 %v346
  %846 = vmatpush1.msra.mxu0 %v345
  %847 = vmatprep.subr.mxu0 %v352
  %848 = vmatpush1.msra.mxu0 %v351
  %849 = vmatprep.subr.mxu0 %v358
  %850 = vmatpush1.msra.mxu0 %v357
  %851 = vmatprep.subr.mxu0 %v364
  %852 = vmatpush1.msra.mxu0 %v363
  %853 = vmatprep.subr.mxu0 %v370
  %854 = vmatpush1.msra.mxu0 %v369
  %855 = vmatprep.subr.mxu0 %v376
  %856 = vmatpush1.msra.mxu0 %v375
  %857 = vmatprep.subr.mxu0 %v382
  %858 = vmatpush1.msra.mxu0 %v381
  %859 = vmatprep.subr.mxu0 %v388
  %860 = vmatpush1.msra.mxu0 %v387
  %861 = vmatprep.subr.mxu0 %v394
  %862 = vmatpush1.msra.mxu0 %v393
  %863 = vmatprep.subr.mxu0 %v400
  %864 = vmatpush1.msra.mxu0 %v399
  %865 = vmatprep.subr.mxu0 %v406
  %866 = vmatpush1.msra.mxu0 %v405
  %867 = vmatprep.subr.mxu0 %v412
  %868 = vmatpush1.msra.mxu0 %v411
  %869 = vmatprep.subr.mxu0 %v418
  %870 = vmatpush1.msra.mxu0 %v417
  %871 = vmatprep.subr.mxu0 %v424
  %872 = vmatpush1.msra.mxu0 %v423
  %873 = vmatprep.subr.mxu0 %v430
  %874 = vmatpush1.msra.mxu0 %v429
  %875 = vmatprep.subr.mxu0 %v436
  %876 = vmatpush1.msra.mxu0 %v435
  %877 = vmatprep.subr.mxu0 %v442
  %878 = vmatpush1.msra.mxu0 %v441
  %879 = vmatprep.subr.mxu0 %v448
  %880 = vmatpush1.msra.mxu0 %v447
  %881 = vmatprep.mubr.f32.mxu0 %v256
  %882 = vmatmul.mubr.f32.gmra.mrb[0].mxu0 %v255
  %v883 = vpop.f32.mrb[0].mxu0
  %v884 = vadd.f32 %v656, %v883
  %v885 = vpop.f32.mrb[0].mxu0
  %v886 = vadd.f32 %v660, %v885
  %887 = vdwg.mxu0
  %888 = vmatprep.subr.mxu0 %v454
  %889 = vmatpush1.msra.mxu0 %v453
  %890 = vmatprep.subr.mxu0 %v460
  %891 = vmatpush1.msra.mxu0 %v459
  %892 = vmatprep.subr.mxu0 %v466
  %893 = vmatpush1.msra.mxu0 %v465
  %894 = vmatprep.subr.mxu0 %v472
  %895 = vmatpush1.msra.mxu0 %v471
  %896 = vmatprep.subr.mxu0 %v478
  %897 = vmatpush1.msra.mxu0 %v477
  %898 = vmatprep.subr.mxu0 %v484
  %899 = vmatpush1.msra.mxu0 %v483
  %900 = vmatprep.subr.mxu0 %v490
  %901 = vmatpush1.msra.mxu0 %v489
  %902 = vmatprep.subr.mxu0 %v496
  %903 = vmatpush1.msra.mxu0 %v495
  %904 = vmatprep.subr.mxu0 %v502
  %905 = vmatpush1.msra.mxu0 %v501
  %906 = vmatprep.subr.mxu0 %v508
  %907 = vmatpush1.msra.mxu0 %v507
  %908 = vmatprep.subr.mxu0 %v514
  %909 = vmatpush1.msra.mxu0 %v513
  %910 = vmatprep.subr.mxu0 %v520
  %911 = vmatpush1.msra.mxu0 %v519
  %912 = vmatprep.subr.mxu0 %v526
  %913 = vmatpush1.msra.mxu0 %v525
  %914 = vmatprep.subr.mxu0 %v532
  %915 = vmatpush1.msra.mxu0 %v531
  %916 = vmatprep.subr.mxu0 %v538
  %917 = vmatpush1.msra.mxu0 %v537
  %918 = vmatprep.subr.mxu0 %v544
  %919 = vmatpush1.msra.mxu0 %v543
  %920 = vmatprep.subr.mxu0 %v550
  %921 = vmatpush1.msra.mxu0 %v549
  %922 = vmatprep.subr.mxu0 %v556
  %923 = vmatpush1.msra.mxu0 %v555
  %924 = vmatprep.subr.mxu0 %v562
  %925 = vmatpush1.msra.mxu0 %v561
  %926 = vmatprep.subr.mxu0 %v568
  %927 = vmatpush1.msra.mxu0 %v567
  %928 = vmatprep.subr.mxu0 %v574
  %929 = vmatpush1.msra.mxu0 %v573
  %930 = vmatprep.subr.mxu0 %v580
  %931 = vmatpush1.msra.mxu0 %v579
  %932 = vmatprep.subr.mxu0 %v586
  %933 = vmatpush1.msra.mxu0 %v585
  %934 = vmatprep.subr.mxu0 %v592
  %935 = vmatpush1.msra.mxu0 %v591
  %936 = vmatprep.subr.mxu0 %v598
  %937 = vmatpush1.msra.mxu0 %v597
  %938 = vmatprep.subr.mxu0 %v604
  %939 = vmatpush1.msra.mxu0 %v603
  %940 = vmatprep.subr.mxu0 %v610
  %941 = vmatpush1.msra.mxu0 %v609
  %942 = vmatprep.subr.mxu0 %v616
  %943 = vmatpush1.msra.mxu0 %v615
  %944 = vmatprep.subr.mxu0 %v622
  %945 = vmatpush1.msra.mxu0 %v621
  %946 = vmatprep.subr.mxu0 %v628
  %947 = vmatpush1.msra.mxu0 %v627
  %948 = vmatprep.subr.mxu0 %v634
  %949 = vmatpush1.msra.mxu0 %v633
  %950 = vmatprep.subr.mxu0 %v640
  %951 = vmatpush1.msra.mxu0 %v639
  %952 = vmatprep.mubr.f32.mxu0 %v258
  %953 = vmatmul.mubr.f32.gmra.mrb[0].mxu0 %v257
  %v954 = vpop.f32.mrb[0].mxu0
  %v955 = vadd.f32 %v884, %v954
  %v956 = vpop.f32.mrb[0].mxu0
  %v957 = vadd.f32 %v886, %v956
  %958 = vdwg.mxu0
  %959 = vmatprep.subr.mxu0 %v264
  %960 = vmatpush1.msra.mxu0 %v263
  %961 = vmatprep.subr.mxu0 %v270
  %962 = vmatpush1.msra.mxu0 %v269
  %963 = vmatprep.subr.mxu0 %v276
  %964 = vmatpush1.msra.mxu0 %v275
  %965 = vmatprep.subr.mxu0 %v282
  %966 = vmatpush1.msra.mxu0 %v281
  %967 = vmatprep.subr.mxu0 %v288
  %968 = vmatpush1.msra.mxu0 %v287
  %969 = vmatprep.subr.mxu0 %v294
  %970 = vmatpush1.msra.mxu0 %v293
  %971 = vmatprep.subr.mxu0 %v300
  %972 = vmatpush1.msra.mxu0 %v299
  %973 = vmatprep.subr.mxu0 %v306
  %974 = vmatpush1.msra.mxu0 %v305
  %975 = vmatprep.subr.mxu0 %v312
  %976 = vmatpush1.msra.mxu0 %v311
  %977 = vmatprep.subr.mxu0 %v318
  %978 = vmatpush1.msra.mxu0 %v317
  %979 = vmatprep.subr.mxu0 %v324
  %980 = vmatpush1.msra.mxu0 %v323
  %981 = vmatprep.subr.mxu0 %v330
  %982 = vmatpush1.msra.mxu0 %v329
  %983 = vmatprep.subr.mxu0 %v336
  %984 = vmatpush1.msra.mxu0 %v335
  %985 = vmatprep.subr.mxu0 %v342
  %986 = vmatpush1.msra.mxu0 %v341
  %987 = vmatprep.subr.mxu0 %v348
  %988 = vmatpush1.msra.mxu0 %v347
  %989 = vmatprep.subr.mxu0 %v354
  %990 = vmatpush1.msra.mxu0 %v353
  %991 = vmatprep.subr.mxu0 %v360
  %992 = vmatpush1.msra.mxu0 %v359
  %993 = vmatprep.subr.mxu0 %v366
  %994 = vmatpush1.msra.mxu0 %v365
  %995 = vmatprep.subr.mxu0 %v372
  %996 = vmatpush1.msra.mxu0 %v371
  %997 = vmatprep.subr.mxu0 %v378
  %998 = vmatpush1.msra.mxu0 %v377
  %999 = vmatprep.subr.mxu0 %v384
  %1000 = vmatpush1.msra.mxu0 %v383
  %1001 = vmatprep.subr.mxu0 %v390
  %1002 = vmatpush1.msra.mxu0 %v389
  %1003 = vmatprep.subr.mxu0 %v396
  %1004 = vmatpush1.msra.mxu0 %v395
  %1005 = vmatprep.subr.mxu0 %v402
  %1006 = vmatpush1.msra.mxu0 %v401
  %1007 = vmatprep.subr.mxu0 %v408
  %1008 = vmatpush1.msra.mxu0 %v407
  %1009 = vmatprep.subr.mxu0 %v414
  %1010 = vmatpush1.msra.mxu0 %v413
  %1011 = vmatprep.subr.mxu0 %v420
  %1012 = vmatpush1.msra.mxu0 %v419
  %1013 = vmatprep.subr.mxu0 %v426
  %1014 = vmatpush1.msra.mxu0 %v425
  %1015 = vmatprep.subr.mxu0 %v432
  %1016 = vmatpush1.msra.mxu0 %v431
  %1017 = vmatprep.subr.mxu0 %v438
  %1018 = vmatpush1.msra.mxu0 %v437
  %1019 = vmatprep.subr.mxu0 %v444
  %1020 = vmatpush1.msra.mxu0 %v443
  %1021 = vmatprep.subr.mxu0 %v450
  %1022 = vmatpush1.msra.mxu0 %v449
  %1023 = vmatprep.mubr.f32.mxu0 %v256
  %1024 = vmatmul.mubr.f32.gmra.mrb[0].mxu0 %v255
  %v1025 = vpop.f32.mrb[0].mxu0
  %v1026 = vadd.f32 %v664, %v1025
  %v1027 = vpop.f32.mrb[0].mxu0
  %v1028 = vadd.f32 %v668, %v1027
  %1029 = vdwg.mxu0
  %1030 = vmatprep.subr.mxu0 %v456
  %1031 = vmatpush1.msra.mxu0 %v455
  %1032 = vmatprep.subr.mxu0 %v462
  %1033 = vmatpush1.msra.mxu0 %v461
  %1034 = vmatprep.subr.mxu0 %v468
  %1035 = vmatpush1.msra.mxu0 %v467
  %1036 = vmatprep.subr.mxu0 %v474
  %1037 = vmatpush1.msra.mxu0 %v473
  %1038 = vmatprep.subr.mxu0 %v480
  %1039 = vmatpush1.msra.mxu0 %v479
  %1040 = vmatprep.subr.mxu0 %v486
  %1041 = vmatpush1.msra.mxu0 %v485
  %1042 = vmatprep.subr.mxu0 %v492
  %1043 = vmatpush1.msra.mxu0 %v491
  %1044 = vmatprep.subr.mxu0 %v498
  %1045 = vmatpush1.msra.mxu0 %v497
  %1046 = vmatprep.subr.mxu0 %v504
  %1047 = vmatpush1.msra.mxu0 %v503
  %1048 = vmatprep.subr.mxu0 %v510
  %1049 = vmatpush1.msra.mxu0 %v509
  %1050 = vmatprep.subr.mxu0 %v516
  %1051 = vmatpush1.msra.mxu0 %v515
  %1052 = vmatprep.subr.mxu0 %v522
  %1053 = vmatpush1.msra.mxu0 %v521
  %1054 = vmatprep.subr.mxu0 %v528
  %1055 = vmatpush1.msra.mxu0 %v527
  %1056 = vmatprep.subr.mxu0 %v534
  %1057 = vmatpush1.msra.mxu0 %v533
  %1058 = vmatprep.subr.mxu0 %v540
  %1059 = vmatpush1.msra.mxu0 %v539
  %1060 = vmatprep.subr.mxu0 %v546
  %1061 = vmatpush1.msra.mxu0 %v545
  %1062 = vmatprep.subr.mxu0 %v552
  %1063 = vmatpush1.msra.mxu0 %v551
  %1064 = vmatprep.subr.mxu0 %v558
  %1065 = vmatpush1.msra.mxu0 %v557
  %1066 = vmatprep.subr.mxu0 %v564
  %1067 = vmatpush1.msra.mxu0 %v563
  %1068 = vmatprep.subr.mxu0 %v570
  %1069 = vmatpush1.msra.mxu0 %v569
  %1070 = vmatprep.subr.mxu0 %v576
  %1071 = vmatpush1.msra.mxu0 %v575
  %1072 = vmatprep.subr.mxu0 %v582
  %1073 = vmatpush1.msra.mxu0 %v581
  %1074 = vmatprep.subr.mxu0 %v588
  %1075 = vmatpush1.msra.mxu0 %v587
  %1076 = vmatprep.subr.mxu0 %v594
  %1077 = vmatpush1.msra.mxu0 %v593
  %1078 = vmatprep.subr.mxu0 %v600
  %1079 = vmatpush1.msra.mxu0 %v599
  %1080 = vmatprep.subr.mxu0 %v606
  %1081 = vmatpush1.msra.mxu0 %v605
  %1082 = vmatprep.subr.mxu0 %v612
  %1083 = vmatpush1.msra.mxu0 %v611
  %1084 = vmatprep.subr.mxu0 %v618
  %1085 = vmatpush1.msra.mxu0 %v617
  %1086 = vmatprep.subr.mxu0 %v624
  %1087 = vmatpush1.msra.mxu0 %v623
  %1088 = vmatprep.subr.mxu0 %v630
  %1089 = vmatpush1.msra.mxu0 %v629
  %1090 = vmatprep.subr.mxu0 %v636
  %1091 = vmatpush1.msra.mxu0 %v635
  %1092 = vmatprep.subr.mxu0 %v642
  %1093 = vmatpush1.msra.mxu0 %v641
  %1094 = vmatprep.mubr.f32.mxu0 %v258
  %1095 = vmatmul.mubr.f32.gmra.mrb[0].mxu0 %v257
  %v1096 = vpop.f32.mrb[0].mxu0
  %v1097 = vadd.f32 %v1026, %v1096
  %v1098 = vpop.f32.mrb[0].mxu0
  %v1099 = vadd.f32 %v1028, %v1098
  %1100 = vdwg.mxu0
  %v1101 = vld [vmem:[%s5] sm:$0xff]
  %v1102 = vld [vmem:[%s5 + $0x8] sm:$0xff]
  %v1103 = vld [vmem:[%s5 + $0x10] sm:$0xff]
  %v1104 = vld [vmem:[%s5 + $0x18] sm:$0xff]
  %v1105 = vld [vmem:[%s5 + $0x20] sm:$0xff]
  %v1106 = vld [vmem:[%s5 + $0x28] sm:$0xff]
  %v1107 = vld [vmem:[%s5 + $0x30] sm:$0xff]
  %v1108 = vld [vmem:[%s5 + $0x38] sm:$0xff]
  %v1109 = vld [vmem:[%s5 + $0x40] sm:$0xff]
  %v1110 = vld [vmem:[%s5 + $0x48] sm:$0xff]
  %v1111 = vld [vmem:[%s5 + $0x50] sm:$0xff]
  %v1112 = vld [vmem:[%s5 + $0x58] sm:$0xff]
  %v1113 = vld [vmem:[%s5 + $0x60] sm:$0xff]
  %v1114 = vld [vmem:[%s5 + $0x68] sm:$0xff]
  %v1115 = vld [vmem:[%s5 + $0x70] sm:$0xff]
  %v1116 = vld [vmem:[%s5 + $0x78] sm:$0xff]
  %v1117 = vld [vmem:[%s5 + $0x80] sm:$0xff]
  %v1118 = vld [vmem:[%s5 + $0x88] sm:$0xff]
  %v1119 = vld [vmem:[%s5 + $0x90] sm:$0xff]
  %v1120 = vld [vmem:[%s5 + $0x98] sm:$0xff]
  %v1121 = vld [vmem:[%s5 + $0xa0] sm:$0xff]
  %v1122 = vld [vmem:[%s5 + $0xa8] sm:$0xff]
  %v1123 = vld [vmem:[%s5 + $0xb0] sm:$0xff]
  %v1124 = vld [vmem:[%s5 + $0xb8] sm:$0xff]
  %v1125 = vld [vmem:[%s5 + $0xc0] sm:$0xff]
  %v1126 = vld [vmem:[%s5 + $0xc8] sm:$0xff]
  %v1127 = vld [vmem:[%s5 + $0xd0] sm:$0xff]
  %v1128 = vld [vmem:[%s5 + $0xd8] sm:$0xff]
  %v1129 = vld [vmem:[%s5 + $0xe0] sm:$0xff]
  %v1130 = vld [vmem:[%s5 + $0xe8] sm:$0xff]
  %v1131 = vld [vmem:[%s5 + $0xf0] sm:$0xff]
  %v1132 = vld [vmem:[%s5 + $0xf8] sm:$0xff]
  %v1133 = vld [vmem:[%s5 + $0x100] sm:$0xff]
  %v1134 = vld [vmem:[%s5 + $0x108] sm:$0xff]
  %v1135 = vld [vmem:[%s5 + $0x110] sm:$0xff]
  %v1136 = vld [vmem:[%s5 + $0x118] sm:$0xff]
  %v1137 = vld [vmem:[%s5 + $0x120] sm:$0xff]
  %v1138 = vld [vmem:[%s5 + $0x128] sm:$0xff]
  %v1139 = vld [vmem:[%s5 + $0x130] sm:$0xff]
  %v1140 = vld [vmem:[%s5 + $0x138] sm:$0xff]
  %v1141 = vld [vmem:[%s5 + $0x140] sm:$0xff]
  %v1142 = vld [vmem:[%s5 + $0x148] sm:$0xff]
  %v1143 = vld [vmem:[%s5 + $0x150] sm:$0xff]
  %v1144 = vld [vmem:[%s5 + $0x158] sm:$0xff]
  %v1145 = vld [vmem:[%s5 + $0x160] sm:$0xff]
  %v1146 = vld [vmem:[%s5 + $0x168] sm:$0xff]
  %v1147 = vld [vmem:[%s5 + $0x170] sm:$0xff]
  %v1148 = vld [vmem:[%s5 + $0x178] sm:$0xff]
  %v1149 = vld [vmem:[%s5 + $0x180] sm:$0xff]
  %v1150 = vld [vmem:[%s5 + $0x188] sm:$0xff]
  %v1151 = vld [vmem:[%s5 + $0x190] sm:$0xff]
  %v1152 = vld [vmem:[%s5 + $0x198] sm:$0xff]
  %v1153 = vld [vmem:[%s5 + $0x1a0] sm:$0xff]
  %v1154 = vld [vmem:[%s5 + $0x1a8] sm:$0xff]
  %v1155 = vld [vmem:[%s5 + $0x1b0] sm:$0xff]
  %v1156 = vld [vmem:[%s5 + $0x1b8] sm:$0xff]
  %v1157 = vld [vmem:[%s5 + $0x1c0] sm:$0xff]
  %v1158 = vld [vmem:[%s5 + $0x1c8] sm:$0xff]
  %v1159 = vld [vmem:[%s5 + $0x1d0] sm:$0xff]
  %v1160 = vld [vmem:[%s5 + $0x1d8] sm:$0xff]
  %v1161 = vld [vmem:[%s5 + $0x1e0] sm:$0xff]
  %v1162 = vld [vmem:[%s5 + $0x1e8] sm:$0xff]
  %v1163 = vld [vmem:[%s5 + $0x1f0] sm:$0xff]
  %v1164 = vld [vmem:[%s5 + $0x1f8] sm:$0xff]
  %v1165 = vld [vmem:[%s5 + $0x200] sm:$0xff]
  %v1166 = vld [vmem:[%s5 + $0x208] sm:$0xff]
  %v1167 = vld [vmem:[%s5 + $0x210] sm:$0xff]
  %v1168 = vld [vmem:[%s5 + $0x218] sm:$0xff]
  %v1169 = vld [vmem:[%s5 + $0x220] sm:$0xff]
  %v1170 = vld [vmem:[%s5 + $0x228] sm:$0xff]
  %v1171 = vld [vmem:[%s5 + $0x230] sm:$0xff]
  %v1172 = vld [vmem:[%s5 + $0x238] sm:$0xff]
  %v1173 = vld [vmem:[%s5 + $0x240] sm:$0xff]
  %v1174 = vld [vmem:[%s5 + $0x248] sm:$0xff]
  %v1175 = vld [vmem:[%s5 + $0x250] sm:$0xff]
  %v1176 = vld [vmem:[%s5 + $0x258] sm:$0xff]
  %v1177 = vld [vmem:[%s5 + $0x260] sm:$0xff]
  %v1178 = vld [vmem:[%s5 + $0x268] sm:$0xff]
  %v1179 = vld [vmem:[%s5 + $0x270] sm:$0xff]
  %v1180 = vld [vmem:[%s5 + $0x278] sm:$0xff]
  %v1181 = vld [vmem:[%s5 + $0x280] sm:$0xff]
  %v1182 = vld [vmem:[%s5 + $0x288] sm:$0xff]
  %v1183 = vld [vmem:[%s5 + $0x290] sm:$0xff]
  %v1184 = vld [vmem:[%s5 + $0x298] sm:$0xff]
  %v1185 = vld [vmem:[%s5 + $0x2a0] sm:$0xff]
  %v1186 = vld [vmem:[%s5 + $0x2a8] sm:$0xff]
  %v1187 = vld [vmem:[%s5 + $0x2b0] sm:$0xff]
  %v1188 = vld [vmem:[%s5 + $0x2b8] sm:$0xff]
  %v1189 = vld [vmem:[%s5 + $0x2c0] sm:$0xff]
  %v1190 = vld [vmem:[%s5 + $0x2c8] sm:$0xff]
  %v1191 = vld [vmem:[%s5 + $0x2d0] sm:$0xff]
  %v1192 = vld [vmem:[%s5 + $0x2d8] sm:$0xff]
  %v1193 = vld [vmem:[%s5 + $0x2e0] sm:$0xff]
  %v1194 = vld [vmem:[%s5 + $0x2e8] sm:$0xff]
  %v1195 = vld [vmem:[%s5 + $0x2f0] sm:$0xff]
  %v1196 = vld [vmem:[%s5 + $0x2f8] sm:$0xff]
  %v1197 = vld [vmem:[%s6] sm:$0x1]
  %v1199 = vlaneseq
  %v1200 = vshrl.u32 %v1199, 7
  %v1201 = vsub.s32 0, %v1200
  %v1202 = vrot.slane %v1197, %v1201
  %1204 = vmatprep.subr.mxu0 0.0
  %1205 = vmatpush1.msra.mxu0 %v1101
  %1206 = vmatprep.subr.mxu0 0.0
  %1207 = vmatpush1.msra.mxu0 %v1102
  %1208 = vmatprep.subr.mxu0 0.0
  %1209 = vmatpush1.msra.mxu0 %v1103
  %1210 = vmatprep.subr.mxu0 0.0
  %1211 = vmatpush1.msra.mxu0 %v1104
  %1212 = vmatprep.subr.mxu0 0.0
  %1213 = vmatpush1.msra.mxu0 %v1105
  %1214 = vmatprep.subr.mxu0 0.0
  %1215 = vmatpush1.msra.mxu0 %v1106
  %1216 = vmatprep.subr.mxu0 0.0
  %1217 = vmatpush1.msra.mxu0 %v1107
  %1218 = vmatprep.subr.mxu0 0.0
  %1219 = vmatpush1.msra.mxu0 %v1108
  %1220 = vmatprep.subr.mxu0 0.0
  %1221 = vmatpush1.msra.mxu0 %v1109
  %1222 = vmatprep.subr.mxu0 0.0
  %1223 = vmatpush1.msra.mxu0 %v1110
  %1224 = vmatprep.subr.mxu0 0.0
  %1225 = vmatpush1.msra.mxu0 %v1111
  %1226 = vmatprep.subr.mxu0 0.0
  %1227 = vmatpush1.msra.mxu0 %v1112
  %1228 = vmatprep.subr.mxu0 0.0
  %1229 = vmatpush1.msra.mxu0 %v1113
  %1230 = vmatprep.subr.mxu0 0.0
  %1231 = vmatpush1.msra.mxu0 %v1114
  %1232 = vmatprep.subr.mxu0 0.0
  %1233 = vmatpush1.msra.mxu0 %v1115
  %1234 = vmatprep.subr.mxu0 0.0
  %1235 = vmatpush1.msra.mxu0 %v1116
  %1236 = vmatprep.subr.mxu0 0.0
  %1237 = vmatpush1.msra.mxu0 %v1117
  %1238 = vmatprep.subr.mxu0 0.0
  %1239 = vmatpush1.msra.mxu0 %v1118
  %1240 = vmatprep.subr.mxu0 0.0
  %1241 = vmatpush1.msra.mxu0 %v1119
  %1242 = vmatprep.subr.mxu0 0.0
  %1243 = vmatpush1.msra.mxu0 %v1120
  %1244 = vmatprep.subr.mxu0 0.0
  %1245 = vmatpush1.msra.mxu0 %v1121
  %1246 = vmatprep.subr.mxu0 0.0
  %1247 = vmatpush1.msra.mxu0 %v1122
  %1248 = vmatprep.subr.mxu0 0.0
  %1249 = vmatpush1.msra.mxu0 %v1123
  %1250 = vmatprep.subr.mxu0 0.0
  %1251 = vmatpush1.msra.mxu0 %v1124
  %1252 = vmatprep.subr.mxu0 0.0
  %1253 = vmatpush1.msra.mxu0 %v1125
  %1254 = vmatprep.subr.mxu0 0.0
  %1255 = vmatpush1.msra.mxu0 %v1126
  %1256 = vmatprep.subr.mxu0 0.0
  %1257 = vmatpush1.msra.mxu0 %v1127
  %1258 = vmatprep.subr.mxu0 0.0
  %1259 = vmatpush1.msra.mxu0 %v1128
  %1260 = vmatprep.subr.mxu0 0.0
  %1261 = vmatpush1.msra.mxu0 %v1129
  %1262 = vmatprep.subr.mxu0 0.0
  %1263 = vmatpush1.msra.mxu0 %v1130
  %1264 = vmatprep.subr.mxu0 0.0
  %1265 = vmatpush1.msra.mxu0 %v1131
  %1266 = vmatprep.subr.mxu0 0.0
  %1267 = vmatpush1.msra.mxu0 %v1132
  %1268 = vmatprep.mubr.f32.mxu0 %v815
  %1269 = vmatmul.mubr.f32.gmra.mrb[0].mxu0 %v813
  %v1270 = vpop.f32.mrb[0].mxu0
  %v1271 = vadd.f32 %v1202, %v1270
  %v1272 = vpop.f32.mrb[0].mxu0
  %1273 = vdwg.mxu0
  %1274 = vmatprep.subr.mxu0 0.0
  %1275 = vmatpush1.msra.mxu0 %v1133
  %1276 = vmatprep.subr.mxu0 0.0
  %1277 = vmatpush1.msra.mxu0 %v1134
  %1278 = vmatprep.subr.mxu0 0.0
  %1279 = vmatpush1.msra.mxu0 %v1135
  %1280 = vmatprep.subr.mxu0 0.0
  %1281 = vmatpush1.msra.mxu0 %v1136
  %1282 = vmatprep.subr.mxu0 0.0
  %1283 = vmatpush1.msra.mxu0 %v1137
  %1284 = vmatprep.subr.mxu0 0.0
  %1285 = vmatpush1.msra.mxu0 %v1138
  %1286 = vmatprep.subr.mxu0 0.0
  %1287 = vmatpush1.msra.mxu0 %v1139
  %1288 = vmatprep.subr.mxu0 0.0
  %1289 = vmatpush1.msra.mxu0 %v1140
  %1290 = vmatprep.subr.mxu0 0.0
  %1291 = vmatpush1.msra.mxu0 %v1141
  %1292 = vmatprep.subr.mxu0 0.0
  %1293 = vmatpush1.msra.mxu0 %v1142
  %1294 = vmatprep.subr.mxu0 0.0
  %1295 = vmatpush1.msra.mxu0 %v1143
  %1296 = vmatprep.subr.mxu0 0.0
  %1297 = vmatpush1.msra.mxu0 %v1144
  %1298 = vmatprep.subr.mxu0 0.0
  %1299 = vmatpush1.msra.mxu0 %v1145
  %1300 = vmatprep.subr.mxu0 0.0
  %1301 = vmatpush1.msra.mxu0 %v1146
  %1302 = vmatprep.subr.mxu0 0.0
  %1303 = vmatpush1.msra.mxu0 %v1147
  %1304 = vmatprep.subr.mxu0 0.0
  %1305 = vmatpush1.msra.mxu0 %v1148
  %1306 = vmatprep.subr.mxu0 0.0
  %1307 = vmatpush1.msra.mxu0 %v1149
  %1308 = vmatprep.subr.mxu0 0.0
  %1309 = vmatpush1.msra.mxu0 %v1150
  %1310 = vmatprep.subr.mxu0 0.0
  %1311 = vmatpush1.msra.mxu0 %v1151
  %1312 = vmatprep.subr.mxu0 0.0
  %1313 = vmatpush1.msra.mxu0 %v1152
  %1314 = vmatprep.subr.mxu0 0.0
  %1315 = vmatpush1.msra.mxu0 %v1153
  %1316 = vmatprep.subr.mxu0 0.0
  %1317 = vmatpush1.msra.mxu0 %v1154
  %1318 = vmatprep.subr.mxu0 0.0
  %1319 = vmatpush1.msra.mxu0 %v1155
  %1320 = vmatprep.subr.mxu0 0.0
  %1321 = vmatpush1.msra.mxu0 %v1156
  %1322 = vmatprep.subr.mxu0 0.0
  %1323 = vmatpush1.msra.mxu0 %v1157
  %1324 = vmatprep.subr.mxu0 0.0
  %1325 = vmatpush1.msra.mxu0 %v1158
  %1326 = vmatprep.subr.mxu0 0.0
  %1327 = vmatpush1.msra.mxu0 %v1159
  %1328 = vmatprep.subr.mxu0 0.0
  %1329 = vmatpush1.msra.mxu0 %v1160
  %1330 = vmatprep.subr.mxu0 0.0
  %1331 = vmatpush1.msra.mxu0 %v1161
  %1332 = vmatprep.subr.mxu0 0.0
  %1333 = vmatpush1.msra.mxu0 %v1162
  %1334 = vmatprep.subr.mxu0 0.0
  %1335 = vmatpush1.msra.mxu0 %v1163
  %1336 = vmatprep.subr.mxu0 0.0
  %1337 = vmatpush1.msra.mxu0 %v1164
  %1338 = vmatprep.mubr.f32.mxu0 %v957
  %1339 = vmatmul.mubr.f32.gmra.mrb[0].mxu0 %v955
  %v1340 = vpop.f32.mrb[0].mxu0
  %v1341 = vadd.f32 %v1271, %v1340
  %v1342 = vpop.f32.mrb[0].mxu0
  %1343 = vdwg.mxu0
  %1344 = vmatprep.subr.mxu0 0.0
  %1345 = vmatpush1.msra.mxu0 %v1165
  %1346 = vmatprep.subr.mxu0 0.0
  %1347 = vmatpush1.msra.mxu0 %v1166
  %1348 = vmatprep.subr.mxu0 0.0
  %1349 = vmatpush1.msra.mxu0 %v1167
  %1350 = vmatprep.subr.mxu0 0.0
  %1351 = vmatpush1.msra.mxu0 %v1168
  %1352 = vmatprep.subr.mxu0 0.0
  %1353 = vmatpush1.msra.mxu0 %v1169
  %1354 = vmatprep.subr.mxu0 0.0
  %1355 = vmatpush1.msra.mxu0 %v1170
  %1356 = vmatprep.subr.mxu0 0.0
  %1357 = vmatpush1.msra.mxu0 %v1171
  %1358 = vmatprep.subr.mxu0 0.0
  %1359 = vmatpush1.msra.mxu0 %v1172
  %1360 = vmatprep.subr.mxu0 0.0
  %1361 = vmatpush1.msra.mxu0 %v1173
  %1362 = vmatprep.subr.mxu0 0.0
  %1363 = vmatpush1.msra.mxu0 %v1174
  %1364 = vmatprep.subr.mxu0 0.0
  %1365 = vmatpush1.msra.mxu0 %v1175
  %1366 = vmatprep.subr.mxu0 0.0
  %1367 = vmatpush1.msra.mxu0 %v1176
  %1368 = vmatprep.subr.mxu0 0.0
  %1369 = vmatpush1.msra.mxu0 %v1177
  %1370 = vmatprep.subr.mxu0 0.0
  %1371 = vmatpush1.msra.mxu0 %v1178
  %1372 = vmatprep.subr.mxu0 0.0
  %1373 = vmatpush1.msra.mxu0 %v1179
  %1374 = vmatprep.subr.mxu0 0.0
  %1375 = vmatpush1.msra.mxu0 %v1180
  %1376 = vmatprep.subr.mxu0 0.0
  %1377 = vmatpush1.msra.mxu0 %v1181
  %1378 = vmatprep.subr.mxu0 0.0
  %1379 = vmatpush1.msra.mxu0 %v1182
  %1380 = vmatprep.subr.mxu0 0.0
  %1381 = vmatpush1.msra.mxu0 %v1183
  %1382 = vmatprep.subr.mxu0 0.0
  %1383 = vmatpush1.msra.mxu0 %v1184
  %1384 = vmatprep.subr.mxu0 0.0
  %1385 = vmatpush1.msra.mxu0 %v1185
  %1386 = vmatprep.subr.mxu0 0.0
  %1387 = vmatpush1.msra.mxu0 %v1186
  %1388 = vmatprep.subr.mxu0 0.0
  %1389 = vmatpush1.msra.mxu0 %v1187
  %1390 = vmatprep.subr.mxu0 0.0
  %1391 = vmatpush1.msra.mxu0 %v1188
  %1392 = vmatprep.subr.mxu0 0.0
  %1393 = vmatpush1.msra.mxu0 %v1189
  %1394 = vmatprep.subr.mxu0 0.0
  %1395 = vmatpush1.msra.mxu0 %v1190
  %1396 = vmatprep.subr.mxu0 0.0
  %1397 = vmatpush1.msra.mxu0 %v1191
  %1398 = vmatprep.subr.mxu0 0.0
  %1399 = vmatpush1.msra.mxu0 %v1192
  %1400 = vmatprep.subr.mxu0 0.0
  %1401 = vmatpush1.msra.mxu0 %v1193
  %1402 = vmatprep.subr.mxu0 0.0
  %1403 = vmatpush1.msra.mxu0 %v1194
  %1404 = vmatprep.subr.mxu0 0.0
  %1405 = vmatpush1.msra.mxu0 %v1195
  %1406 = vmatprep.subr.mxu0 0.0
  %1407 = vmatpush1.msra.mxu0 %v1196
  %1408 = vmatprep.mubr.f32.mxu0 %v1099
  %1409 = vmatmul.mubr.f32.gmra.mrb[0].mxu0 %v1097
  %v1410 = vpop.f32.mrb[0].mxu0
  %v1411 = vadd.f32 %v1341, %v1410
  %v1412 = vpop.f32.mrb[0].mxu0
  %1413 = vdwg.mxu0
  %v1414 = vlaneseq
  %v1415 = vand.u32 %v1414, 127
  %vm1416 = vcmp.ge.s32.totalorder %v1415, 2
  %vm1417 = vcmp.lt.s32.totalorder %v1415, 4
  %vm1418 = vmand %vm1416, %vm1417
  %v1419 = vmax.f32 %v1411, -20.0
  %v1420 = vmin.f32 %v1419, 2.0
  %v1421 = vmul.f32 %v1420, 1.442695
  %v1422 = vpow.pop %v1421
  %v1423 = vsel %vm1418, %v1422, %v1411
  %1424 = vst [vmem:[%s7] sm:$0x3] %v1423
  // Predicated region
  $region30: #{actor_net_forward.7} parent=0 // pred_check
    _
  $region31: #{actor_net_forward.7} parent=0 // pred_check_branch
    %1426 = sbr.rel (0) target = $region33
  $region32: #{actor_net_forward.7} parent=0 // pred_region
    _
  $region33: #{actor_net_forward.7} parent=0 // pred_fallthru
    _
  // Predicated region
  $region34: #{actor_net_forward.7} parent=0 // pred_check
    _
  $region35: #{actor_net_forward.7} parent=0 // pred_check_branch
    %1428 = sbr.rel (0) target = $region37
  $region36: #{actor_net_forward.7} parent=0 // pred_region
    _
  $region37: #{actor_net_forward.7} parent=0 // pred_fallthru
    _

</llo_original>
